<compile_context>
chip_gen: v5e
topology: v5e:2x2
jax: 0.10.0
libtpu: 0.0.40
codegen_flags: <defaults>
</compile_context>

<pallas_src>
import jax
import jax.numpy as jnp
from jax.experimental import pallas as pl
from jax.experimental.pallas import tpu as pltpu


def _round_up(v, m):
    return ((v + m - 1) // m) * m


def _pad_gate_stripes(w, H, Hp):
    """(..., 4H) -> (..., 4*Hp): each gate moved into its own Hp-wide (128-aligned) stripe."""
    if Hp == H:
        return w
    pad_cfg = [(0, 0)] * (w.ndim - 1) + [(0, Hp - H)]
    parts = [jnp.pad(w[..., j * H:(j + 1) * H], pad_cfg) for j in range(4)]
    return jnp.concatenate(parts, axis=-1)


def _lstm_fc_kernel(x_ref, wih_ref, whh_ref, b_ref, wfc_ref, bfc_ref,
                    out_ref, xw_ref):
    # x_ref  : (T, Bp, D)   time-major input
    # wih_ref: (D, Gp)      input weights, gate-striped
    # whh_ref: (Hp, Gp)     recurrent weights, gate-striped
    # b_ref  : (1, Gp)      combined bias (b_ih + b_hh), gate-striped
    # wfc_ref: (Hp, Op)     FC head weights (zero-padded)
    # bfc_ref: (1, Op)      FC head bias    (zero-padded)
    # out_ref: (Bp, Op)     lane-dense output block
    # xw_ref : (T, Bp, Gp)  VMEM scratch holding the hoisted input projection
    T, Bp, _ = x_ref.shape
    Hp = whh_ref.shape[0]

    # ---- Phase 1: input projection for all time steps (off the critical path).
    # Static Python loop -> static store indices; T small so full unrolling is fine.
    for t in range(T):
        xw_ref[t] = (jnp.dot(x_ref[t], wih_ref[...],
                             preferred_element_type=jnp.float32)
                     + b_ref[...])

    # ---- Phase 2: sequential recurrence; only h @ W_hh remains per step.
    def step(t, carry):
        h, c = carry
        gates = xw_ref[t] + jnp.dot(h, whh_ref[...],
                                    preferred_element_type=jnp.float32)
        # Each gate is a full 128-lane stripe -> pure lane slices, no relayout.
        i_g = jax.nn.sigmoid(gates[:, 0 * Hp:1 * Hp])
        f_g = jax.nn.sigmoid(gates[:, 1 * Hp:2 * Hp])
        g_g = jnp.tanh(gates[:, 2 * Hp:3 * Hp])
        o_g = jax.nn.sigmoid(gates[:, 3 * Hp:4 * Hp])
        c_new = f_g * c + i_g * g_g
        h_new = o_g * jnp.tanh(c_new)
        return h_new, c_new

    h0 = jnp.zeros((Bp, Hp), jnp.float32)
    c0 = jnp.zeros((Bp, Hp), jnp.float32)
    h_last, _ = jax.lax.fori_loop(0, T, step, (h0, c0), unroll=True)

    # ---- Phase 3: linear head on the last hidden state; lane-dense store.
    out_ref[...] = (jnp.dot(h_last, wfc_ref[...],
                            preferred_element_type=jnp.float32)
                    + bfc_ref[...]).astype(out_ref.dtype)


@jax.jit
def recurrent_neural_network_forward(x, params):
    """x: (B, T, D) float32, batch_first like the PyTorch module."""
    B, T, D = x.shape
    w_ih_t = params["w_ih_t"]      # (D, 4H)
    w_hh_t = params["w_hh_t"]      # (H, 4H)
    b = params["b"]                # (1, 4H)  (= b_ih + b_hh)
    w_fc_t = params["w_fc_t"]      # (H, O)
    b_fc = params["b_fc"]          # (1, O)
    H = w_hh_t.shape[0]
    O = w_fc_t.shape[1]

    Hp = _round_up(H, 128)         # per-gate stripe width (lane-aligned)
    Gp = 4 * Hp
    Bp = _round_up(B, 8)           # sublane-aligned batch
    Op = _round_up(O, 128)         # lane-dense output width

    # Weight/bias padding into the gate-striped, hardware-aligned layout
    # (cheap; in a real deployment these would be prepared once and cached).
    w_ih_t_p = _pad_gate_stripes(w_ih_t, H, Hp)                          # (D, Gp)
    b_p = _pad_gate_stripes(b, H, Hp)                                    # (1, Gp)
    w_hh_t_p = jnp.pad(_pad_gate_stripes(w_hh_t, H, Hp),
                       ((0, Hp - H), (0, 0)))                            # (Hp, Gp)
    w_fc_t_p = jnp.pad(w_fc_t, ((0, Hp - H), (0, Op - O)))               # (Hp, Op)
    b_fc_p = jnp.pad(b_fc, ((0, 0), (0, Op - O)))                        # (1, Op)

    # Time-major, sublane-padded input (single tiny fused transpose+pad).
    x_tm = jnp.pad(jnp.transpose(x, (1, 0, 2)),
                   ((0, 0), (0, Bp - B), (0, 0)))                        # (T, Bp, D)

    vmem_spec = pl.BlockSpec(memory_space=pltpu.MemorySpace.VMEM)
    out = pl.pallas_call(
        _lstm_fc_kernel,
        out_shape=jax.ShapeDtypeStruct((Bp, Op), jnp.float32),
        in_specs=[vmem_spec] * 6,
        out_specs=vmem_spec,
        scratch_shapes=[pltpu.VMEM((T, Bp, Gp), jnp.float32)],
    )(x_tm, w_ih_t_p, w_hh_t_p, b_p, w_fc_t_p, b_fc_p)

    return out[:B, :O]


def _reference_forward(x, params):
    """Pure-JAX reference mirroring torch.nn.LSTM + Linear (f32 throughout)."""
    B, T, D = x.shape
    H = params["w_hh_t"].shape[0]
    hi = jax.lax.Precision.HIGHEST
    h = jnp.zeros((B, H), jnp.float32)
    c = jnp.zeros((B, H), jnp.float32)
    for t in range(T):
        g = (jnp.dot(x[:, t, :], params["w_ih_t"], precision=hi)
             + jnp.dot(h, params["w_hh_t"], precision=hi) + params["b"])
        i = jax.nn.sigmoid(g[:, 0 * H:1 * H])
        f = jax.nn.sigmoid(g[:, 1 * H:2 * H])
        gg = jnp.tanh(g[:, 2 * H:3 * H])
        o = jax.nn.sigmoid(g[:, 3 * H:4 * H])
        c = f * c + i * gg
        h = o * jnp.tanh(c)
    return jnp.dot(h, params["w_fc_t"], precision=hi) + params["b_fc"]


def init_params(key, input_dim, hidden_dim, output_dim):
    """Deterministic init, mirroring PyTorch's U(-1/sqrt(H), 1/sqrt(H)) shapes."""
    k = jax.random.split(key, 6)
    s = 1.0 / jnp.sqrt(hidden_dim)
    w_ih = jax.random.uniform(k[0], (4 * hidden_dim, input_dim), jnp.float32, -s, s)
    w_hh = jax.random.uniform(k[1], (4 * hidden_dim, hidden_dim), jnp.float32, -s, s)
    b_ih = jax.random.uniform(k[2], (4 * hidden_dim,), jnp.float32, -s, s)
    b_hh = jax.random.uniform(k[3], (4 * hidden_dim,), jnp.float32, -s, s)
    w_fc = jax.random.uniform(k[4], (output_dim, hidden_dim), jnp.float32, -s, s)
    b_fc = jax.random.uniform(k[5], (output_dim,), jnp.float32, -s, s)
    return {
        "w_ih_t": w_ih.T,                       # (D, 4H)
        "w_hh_t": w_hh.T,                       # (H, 4H)
        "b": (b_ih + b_hh).reshape(1, -1),      # (1, 4H)
        "w_fc_t": w_fc.T,                       # (H, O)
        "b_fc": b_fc.reshape(1, -1),            # (1, O)
    }


if __name__ == "__main__":
    batch, seq, input_dim, hidden_dim, output_dim = 2, 8, 16, 32, 8

    key = jax.random.PRNGKey(0)
    kx, kp = jax.random.split(key)
    x = jax.random.normal(kx, (batch, seq, input_dim), jnp.float32)
    params = init_params(kp, input_dim, hidden_dim, output_dim)

    y = jax.block_until_ready(recurrent_neural_network_forward(x, params))
    y_ref = _reference_forward(x, params)

    assert y.shape == (batch, output_dim)
    assert jnp.allclose(y, y_ref, atol=2e-4, rtol=2e-4), "mismatch vs reference"

    print("KERNEL_OK")
</pallas_src>

<mosaic_0001>
module attributes {stable_mosaic.version = 11 : i64} {
  func.func @_lstm_fc_kernel(%arg0: memref<8x8x16xf32, #tpu.memory_space<vmem>>, %arg1: memref<16x512xf32, #tpu.memory_space<vmem>>, %arg2: memref<128x512xf32, #tpu.memory_space<vmem>>, %arg3: memref<1x512xf32, #tpu.memory_space<vmem>>, %arg4: memref<128x128xf32, #tpu.memory_space<vmem>>, %arg5: memref<1x128xf32, #tpu.memory_space<vmem>>, %arg6: memref<8x128xf32, #tpu.memory_space<vmem>>, %arg7: memref<8x8x512xf32, #tpu.memory_space<vmem>>) attributes {dimension_semantics = [], scalar_prefetch = 0 : i64, scratch_operands = 1 : i64, tpu.core_type = #tpu.core_type<tc>} {
    %c0 = arith.constant 0 : index
    %c0_0 = arith.constant 0 : index
    %c0_1 = arith.constant 0 : index
    %0 = vector.load %arg0[%c0, %c0_0, %c0_1] : memref<8x8x16xf32, #tpu.memory_space<vmem>>, vector<1x8x16xf32>
    %1 = vector.shape_cast %0 : vector<1x8x16xf32> to vector<8x16xf32>
    %c0_2 = arith.constant 0 : index
    %c0_3 = arith.constant 0 : index
    %2 = vector.load %arg1[%c0_2, %c0_3] : memref<16x512xf32, #tpu.memory_space<vmem>>, vector<16x512xf32>
    %cst = arith.constant dense<0.000000e+00> : vector<8x512xf32>
    %3 = tpu.matmul %1, %2, %cst {dimension_numbers = #tpu.dot_dimension_numbers<[1], [0], [0], [1], [0, 0, 1, 1], [], []>} : vector<8x16xf32>, vector<16x512xf32>, vector<8x512xf32> -> vector<8x512xf32>
    %c0_4 = arith.constant 0 : index
    %c0_5 = arith.constant 0 : index
    %4 = vector.load %arg3[%c0_4, %c0_5] : memref<1x512xf32, #tpu.memory_space<vmem>>, vector<1x512xf32>
    %5 = vector.broadcast %4 : vector<1x512xf32> to vector<8x512xf32>
    %6 = arith.addf %3, %5 : vector<8x512xf32>
    %c0_6 = arith.constant 0 : index
    %c0_7 = arith.constant 0 : index
    %c0_8 = arith.constant 0 : index
    %7 = vector.load %arg7[%c0_6, %c0_7, %c0_8] : memref<8x8x512xf32, #tpu.memory_space<vmem>>, vector<1x8x512xf32>
    %8 = vector.shape_cast %7 : vector<1x8x512xf32> to vector<8x512xf32>
    %9 = vector.shape_cast %6 : vector<8x512xf32> to vector<1x8x512xf32>
    tpu.vector_store %arg7[%c0_6, %c0_7, %c0_8], %9 {strides = array<i32>} : memref<8x8x512xf32, #tpu.memory_space<vmem>>, vector<1x8x512xf32>,
    %c1 = arith.constant 1 : index
    %c0_9 = arith.constant 0 : index
    %c0_10 = arith.constant 0 : index
    %10 = vector.load %arg0[%c1, %c0_9, %c0_10] : memref<8x8x16xf32, #tpu.memory_space<vmem>>, vector<1x8x16xf32>
    %11 = vector.shape_cast %10 : vector<1x8x16xf32> to vector<8x16xf32>
    %c0_11 = arith.constant 0 : index
    %c0_12 = arith.constant 0 : index
    %12 = vector.load %arg1[%c0_11, %c0_12] : memref<16x512xf32, #tpu.memory_space<vmem>>, vector<16x512xf32>
    %cst_13 = arith.constant dense<0.000000e+00> : vector<8x512xf32>
    %13 = tpu.matmul %11, %12, %cst_13 {dimension_numbers = #tpu.dot_dimension_numbers<[1], [0], [0], [1], [0, 0, 1, 1], [], []>} : vector<8x16xf32>, vector<16x512xf32>, vector<8x512xf32> -> vector<8x512xf32>
    %c0_14 = arith.constant 0 : index
    %c0_15 = arith.constant 0 : index
    %14 = vector.load %arg3[%c0_14, %c0_15] : memref<1x512xf32, #tpu.memory_space<vmem>>, vector<1x512xf32>
    %15 = vector.broadcast %14 : vector<1x512xf32> to vector<8x512xf32>
    %16 = arith.addf %13, %15 : vector<8x512xf32>
    %c1_16 = arith.constant 1 : index
    %c0_17 = arith.constant 0 : index
    %c0_18 = arith.constant 0 : index
    %17 = vector.load %arg7[%c1_16, %c0_17, %c0_18] : memref<8x8x512xf32, #tpu.memory_space<vmem>>, vector<1x8x512xf32>
    %18 = vector.shape_cast %17 : vector<1x8x512xf32> to vector<8x512xf32>
    %19 = vector.shape_cast %16 : vector<8x512xf32> to vector<1x8x512xf32>
    tpu.vector_store %arg7[%c1_16, %c0_17, %c0_18], %19 {strides = array<i32>} : memref<8x8x512xf32, #tpu.memory_space<vmem>>, vector<1x8x512xf32>,
    %c2 = arith.constant 2 : index
    %c0_19 = arith.constant 0 : index
    %c0_20 = arith.constant 0 : index
    %20 = vector.load %arg0[%c2, %c0_19, %c0_20] : memref<8x8x16xf32, #tpu.memory_space<vmem>>, vector<1x8x16xf32>
    %21 = vector.shape_cast %20 : vector<1x8x16xf32> to vector<8x16xf32>
    %c0_21 = arith.constant 0 : index
    %c0_22 = arith.constant 0 : index
    %22 = vector.load %arg1[%c0_21, %c0_22] : memref<16x512xf32, #tpu.memory_space<vmem>>, vector<16x512xf32>
    %cst_23 = arith.constant dense<0.000000e+00> : vector<8x512xf32>
    %23 = tpu.matmul %21, %22, %cst_23 {dimension_numbers = #tpu.dot_dimension_numbers<[1], [0], [0], [1], [0, 0, 1, 1], [], []>} : vector<8x16xf32>, vector<16x512xf32>, vector<8x512xf32> -> vector<8x512xf32>
    %c0_24 = arith.constant 0 : index
    %c0_25 = arith.constant 0 : index
    %24 = vector.load %arg3[%c0_24, %c0_25] : memref<1x512xf32, #tpu.memory_space<vmem>>, vector<1x512xf32>
    %25 = vector.broadcast %24 : vector<1x512xf32> to vector<8x512xf32>
    %26 = arith.addf %23, %25 : vector<8x512xf32>
    %c2_26 = arith.constant 2 : index
    %c0_27 = arith.constant 0 : index
    %c0_28 = arith.constant 0 : index
    %27 = vector.load %arg7[%c2_26, %c0_27, %c0_28] : memref<8x8x512xf32, #tpu.memory_space<vmem>>, vector<1x8x512xf32>
    %28 = vector.shape_cast %27 : vector<1x8x512xf32> to vector<8x512xf32>
    %29 = vector.shape_cast %26 : vector<8x512xf32> to vector<1x8x512xf32>
    tpu.vector_store %arg7[%c2_26, %c0_27, %c0_28], %29 {strides = array<i32>} : memref<8x8x512xf32, #tpu.memory_space<vmem>>, vector<1x8x512xf32>,
    %c3 = arith.constant 3 : index
    %c0_29 = arith.constant 0 : index
    %c0_30 = arith.constant 0 : index
    %30 = vector.load %arg0[%c3, %c0_29, %c0_30] : memref<8x8x16xf32, #tpu.memory_space<vmem>>, vector<1x8x16xf32>
    %31 = vector.shape_cast %30 : vector<1x8x16xf32> to vector<8x16xf32>
    %c0_31 = arith.constant 0 : index
    %c0_32 = arith.constant 0 : index
    %32 = vector.load %arg1[%c0_31, %c0_32] : memref<16x512xf32, #tpu.memory_space<vmem>>, vector<16x512xf32>
    %cst_33 = arith.constant dense<0.000000e+00> : vector<8x512xf32>
    %33 = tpu.matmul %31, %32, %cst_33 {dimension_numbers = #tpu.dot_dimension_numbers<[1], [0], [0], [1], [0, 0, 1, 1], [], []>} : vector<8x16xf32>, vector<16x512xf32>, vector<8x512xf32> -> vector<8x512xf32>
    %c0_34 = arith.constant 0 : index
    %c0_35 = arith.constant 0 : index
    %34 = vector.load %arg3[%c0_34, %c0_35] : memref<1x512xf32, #tpu.memory_space<vmem>>, vector<1x512xf32>
    %35 = vector.broadcast %34 : vector<1x512xf32> to vector<8x512xf32>
    %36 = arith.addf %33, %35 : vector<8x512xf32>
    %c3_36 = arith.constant 3 : index
    %c0_37 = arith.constant 0 : index
    %c0_38 = arith.constant 0 : index
    %37 = vector.load %arg7[%c3_36, %c0_37, %c0_38] : memref<8x8x512xf32, #tpu.memory_space<vmem>>, vector<1x8x512xf32>
    %38 = vector.shape_cast %37 : vector<1x8x512xf32> to vector<8x512xf32>
    %39 = vector.shape_cast %36 : vector<8x512xf32> to vector<1x8x512xf32>
    tpu.vector_store %arg7[%c3_36, %c0_37, %c0_38], %39 {strides = array<i32>} : memref<8x8x512xf32, #tpu.memory_space<vmem>>, vector<1x8x512xf32>,
    %c4 = arith.constant 4 : index
    %c0_39 = arith.constant 0 : index
    %c0_40 = arith.constant 0 : index
    %40 = vector.load %arg0[%c4, %c0_39, %c0_40] : memref<8x8x16xf32, #tpu.memory_space<vmem>>, vector<1x8x16xf32>
    %41 = vector.shape_cast %40 : vector<1x8x16xf32> to vector<8x16xf32>
    %c0_41 = arith.constant 0 : index
    %c0_42 = arith.constant 0 : index
    %42 = vector.load %arg1[%c0_41, %c0_42] : memref<16x512xf32, #tpu.memory_space<vmem>>, vector<16x512xf32>
    %cst_43 = arith.constant dense<0.000000e+00> : vector<8x512xf32>
    %43 = tpu.matmul %41, %42, %cst_43 {dimension_numbers = #tpu.dot_dimension_numbers<[1], [0], [0], [1], [0, 0, 1, 1], [], []>} : vector<8x16xf32>, vector<16x512xf32>, vector<8x512xf32> -> vector<8x512xf32>
    %c0_44 = arith.constant 0 : index
    %c0_45 = arith.constant 0 : index
    %44 = vector.load %arg3[%c0_44, %c0_45] : memref<1x512xf32, #tpu.memory_space<vmem>>, vector<1x512xf32>
    %45 = vector.broadcast %44 : vector<1x512xf32> to vector<8x512xf32>
    %46 = arith.addf %43, %45 : vector<8x512xf32>
    %c4_46 = arith.constant 4 : index
    %c0_47 = arith.constant 0 : index
    %c0_48 = arith.constant 0 : index
    %47 = vector.load %arg7[%c4_46, %c0_47, %c0_48] : memref<8x8x512xf32, #tpu.memory_space<vmem>>, vector<1x8x512xf32>
    %48 = vector.shape_cast %47 : vector<1x8x512xf32> to vector<8x512xf32>
    %49 = vector.shape_cast %46 : vector<8x512xf32> to vector<1x8x512xf32>
    tpu.vector_store %arg7[%c4_46, %c0_47, %c0_48], %49 {strides = array<i32>} : memref<8x8x512xf32, #tpu.memory_space<vmem>>, vector<1x8x512xf32>,
    %c5 = arith.constant 5 : index
    %c0_49 = arith.constant 0 : index
    %c0_50 = arith.constant 0 : index
    %50 = vector.load %arg0[%c5, %c0_49, %c0_50] : memref<8x8x16xf32, #tpu.memory_space<vmem>>, vector<1x8x16xf32>
    %51 = vector.shape_cast %50 : vector<1x8x16xf32> to vector<8x16xf32>
    %c0_51 = arith.constant 0 : index
    %c0_52 = arith.constant 0 : index
    %52 = vector.load %arg1[%c0_51, %c0_52] : memref<16x512xf32, #tpu.memory_space<vmem>>, vector<16x512xf32>
    %cst_53 = arith.constant dense<0.000000e+00> : vector<8x512xf32>
    %53 = tpu.matmul %51, %52, %cst_53 {dimension_numbers = #tpu.dot_dimension_numbers<[1], [0], [0], [1], [0, 0, 1, 1], [], []>} : vector<8x16xf32>, vector<16x512xf32>, vector<8x512xf32> -> vector<8x512xf32>
    %c0_54 = arith.constant 0 : index
    %c0_55 = arith.constant 0 : index
    %54 = vector.load %arg3[%c0_54, %c0_55] : memref<1x512xf32, #tpu.memory_space<vmem>>, vector<1x512xf32>
    %55 = vector.broadcast %54 : vector<1x512xf32> to vector<8x512xf32>
    %56 = arith.addf %53, %55 : vector<8x512xf32>
    %c5_56 = arith.constant 5 : index
    %c0_57 = arith.constant 0 : index
    %c0_58 = arith.constant 0 : index
    %57 = vector.load %arg7[%c5_56, %c0_57, %c0_58] : memref<8x8x512xf32, #tpu.memory_space<vmem>>, vector<1x8x512xf32>
    %58 = vector.shape_cast %57 : vector<1x8x512xf32> to vector<8x512xf32>
    %59 = vector.shape_cast %56 : vector<8x512xf32> to vector<1x8x512xf32>
    tpu.vector_store %arg7[%c5_56, %c0_57, %c0_58], %59 {strides = array<i32>} : memref<8x8x512xf32, #tpu.memory_space<vmem>>, vector<1x8x512xf32>,
    %c6 = arith.constant 6 : index
    %c0_59 = arith.constant 0 : index
    %c0_60 = arith.constant 0 : index
    %60 = vector.load %arg0[%c6, %c0_59, %c0_60] : memref<8x8x16xf32, #tpu.memory_space<vmem>>, vector<1x8x16xf32>
    %61 = vector.shape_cast %60 : vector<1x8x16xf32> to vector<8x16xf32>
    %c0_61 = arith.constant 0 : index
    %c0_62 = arith.constant 0 : index
    %62 = vector.load %arg1[%c0_61, %c0_62] : memref<16x512xf32, #tpu.memory_space<vmem>>, vector<16x512xf32>
    %cst_63 = arith.constant dense<0.000000e+00> : vector<8x512xf32>
    %63 = tpu.matmul %61, %62, %cst_63 {dimension_numbers = #tpu.dot_dimension_numbers<[1], [0], [0], [1], [0, 0, 1, 1], [], []>} : vector<8x16xf32>, vector<16x512xf32>, vector<8x512xf32> -> vector<8x512xf32>
    %c0_64 = arith.constant 0 : index
    %c0_65 = arith.constant 0 : index
    %64 = vector.load %arg3[%c0_64, %c0_65] : memref<1x512xf32, #tpu.memory_space<vmem>>, vector<1x512xf32>
    %65 = vector.broadcast %64 : vector<1x512xf32> to vector<8x512xf32>
    %66 = arith.addf %63, %65 : vector<8x512xf32>
    %c6_66 = arith.constant 6 : index
    %c0_67 = arith.constant 0 : index
    %c0_68 = arith.constant 0 : index
    %67 = vector.load %arg7[%c6_66, %c0_67, %c0_68] : memref<8x8x512xf32, #tpu.memory_space<vmem>>, vector<1x8x512xf32>
    %68 = vector.shape_cast %67 : vector<1x8x512xf32> to vector<8x512xf32>
    %69 = vector.shape_cast %66 : vector<8x512xf32> to vector<1x8x512xf32>
    tpu.vector_store %arg7[%c6_66, %c0_67, %c0_68], %69 {strides = array<i32>} : memref<8x8x512xf32, #tpu.memory_space<vmem>>, vector<1x8x512xf32>,
    %c7 = arith.constant 7 : index
    %c0_69 = arith.constant 0 : index
    %c0_70 = arith.constant 0 : index
    %70 = vector.load %arg0[%c7, %c0_69, %c0_70] : memref<8x8x16xf32, #tpu.memory_space<vmem>>, vector<1x8x16xf32>
    %71 = vector.shape_cast %70 : vector<1x8x16xf32> to vector<8x16xf32>
    %c0_71 = arith.constant 0 : index
    %c0_72 = arith.constant 0 : index
    %72 = vector.load %arg1[%c0_71, %c0_72] : memref<16x512xf32, #tpu.memory_space<vmem>>, vector<16x512xf32>
    %cst_73 = arith.constant dense<0.000000e+00> : vector<8x512xf32>
    %73 = tpu.matmul %71, %72, %cst_73 {dimension_numbers = #tpu.dot_dimension_numbers<[1], [0], [0], [1], [0, 0, 1, 1], [], []>} : vector<8x16xf32>, vector<16x512xf32>, vector<8x512xf32> -> vector<8x512xf32>
    %c0_74 = arith.constant 0 : index
    %c0_75 = arith.constant 0 : index
    %74 = vector.load %arg3[%c0_74, %c0_75] : memref<1x512xf32, #tpu.memory_space<vmem>>, vector<1x512xf32>
    %75 = vector.broadcast %74 : vector<1x512xf32> to vector<8x512xf32>
    %76 = arith.addf %73, %75 : vector<8x512xf32>
    %c7_76 = arith.constant 7 : index
    %c0_77 = arith.constant 0 : index
    %c0_78 = arith.constant 0 : index
    %77 = vector.load %arg7[%c7_76, %c0_77, %c0_78] : memref<8x8x512xf32, #tpu.memory_space<vmem>>, vector<1x8x512xf32>
    %78 = vector.shape_cast %77 : vector<1x8x512xf32> to vector<8x512xf32>
    %79 = vector.shape_cast %76 : vector<8x512xf32> to vector<1x8x512xf32>
    tpu.vector_store %arg7[%c7_76, %c0_77, %c0_78], %79 {strides = array<i32>} : memref<8x8x512xf32, #tpu.memory_space<vmem>>, vector<1x8x512xf32>,
    %cst_79 = arith.constant 0.000000e+00 : f32
    %80 = vector.broadcast %cst_79 : f32 to vector<8x128xf32>
    %cst_80 = arith.constant 0.000000e+00 : f32
    %81 = vector.broadcast %cst_80 : f32 to vector<8x128xf32>
    %c0_i32 = arith.constant 0 : i32
    %82 = arith.index_cast %c0_i32 : i32 to index
    %c0_81 = arith.constant 0 : index
    %c0_82 = arith.constant 0 : index
    %83 = vector.load %arg7[%82, %c0_81, %c0_82] : memref<8x8x512xf32, #tpu.memory_space<vmem>>, vector<1x8x512xf32>
    %84 = vector.shape_cast %83 : vector<1x8x512xf32> to vector<8x512xf32>
    %c0_83 = arith.constant 0 : index
    %c0_84 = arith.constant 0 : index
    %85 = vector.load %arg2[%c0_83, %c0_84] : memref<128x512xf32, #tpu.memory_space<vmem>>, vector<128x512xf32>
    %cst_85 = arith.constant dense<0.000000e+00> : vector<8x512xf32>
    %86 = tpu.matmul %80, %85, %cst_85 {dimension_numbers = #tpu.dot_dimension_numbers<[1], [0], [0], [1], [0, 0, 1, 1], [], []>} : vector<8x128xf32>, vector<128x512xf32>, vector<8x512xf32> -> vector<8x512xf32>
    %87 = arith.addf %84, %86 : vector<8x512xf32>
    %88 = vector.extract_strided_slice %87 {offsets = [0, 0], sizes = [8, 128], strides = [1, 1]} : vector<8x512xf32> to vector<8x128xf32>
    %89 = arith.negf %88 : vector<8x128xf32>
    %90 = math.exp %89 : vector<8x128xf32>
    %cst_86 = arith.constant 1.000000e+00 : f32
    %91 = vector.broadcast %cst_86 : f32 to vector<8x128xf32>
    %92 = arith.addf %91, %90 : vector<8x128xf32>
    %93 = arith.divf %91, %92 : vector<8x128xf32>
    %94 = vector.extract_strided_slice %87 {offsets = [0, 128], sizes = [8, 128], strides = [1, 1]} : vector<8x512xf32> to vector<8x128xf32>
    %95 = arith.negf %94 : vector<8x128xf32>
    %96 = math.exp %95 : vector<8x128xf32>
    %cst_87 = arith.constant 1.000000e+00 : f32
    %97 = vector.broadcast %cst_87 : f32 to vector<8x128xf32>
    %98 = arith.addf %97, %96 : vector<8x128xf32>
    %99 = arith.divf %97, %98 : vector<8x128xf32>
    %100 = vector.extract_strided_slice %87 {offsets = [0, 256], sizes = [8, 128], strides = [1, 1]} : vector<8x512xf32> to vector<8x128xf32>
    %101 = math.tanh %100 : vector<8x128xf32>
    %102 = vector.extract_strided_slice %87 {offsets = [0, 384], sizes = [8, 128], strides = [1, 1]} : vector<8x512xf32> to vector<8x128xf32>
    %103 = arith.negf %102 : vector<8x128xf32>
    %104 = math.exp %103 : vector<8x128xf32>
    %cst_88 = arith.constant 1.000000e+00 : f32
    %105 = vector.broadcast %cst_88 : f32 to vector<8x128xf32>
    %106 = arith.addf %105, %104 : vector<8x128xf32>
    %107 = arith.divf %105, %106 : vector<8x128xf32>
    %108 = arith.mulf %99, %81 : vector<8x128xf32>
    %109 = arith.mulf %93, %101 : vector<8x128xf32>
    %110 = arith.addf %108, %109 : vector<8x128xf32>
    %111 = math.tanh %110 : vector<8x128xf32>
    %112 = arith.mulf %107, %111 : vector<8x128xf32>
    %c1_i32 = arith.constant 1 : i32
    %113 = arith.index_cast %c1_i32 : i32 to index
    %c0_89 = arith.constant 0 : index
    %c0_90 = arith.constant 0 : index
    %114 = vector.load %arg7[%113, %c0_89, %c0_90] : memref<8x8x512xf32, #tpu.memory_space<vmem>>, vector<1x8x512xf32>
    %115 = vector.shape_cast %114 : vector<1x8x512xf32> to vector<8x512xf32>
    %c0_91 = arith.constant 0 : index
    %c0_92 = arith.constant 0 : index
    %116 = vector.load %arg2[%c0_91, %c0_92] : memref<128x512xf32, #tpu.memory_space<vmem>>, vector<128x512xf32>
    %cst_93 = arith.constant dense<0.000000e+00> : vector<8x512xf32>
    %117 = tpu.matmul %112, %116, %cst_93 {dimension_numbers = #tpu.dot_dimension_numbers<[1], [0], [0], [1], [0, 0, 1, 1], [], []>} : vector<8x128xf32>, vector<128x512xf32>, vector<8x512xf32> -> vector<8x512xf32>
    %118 = arith.addf %115, %117 : vector<8x512xf32>
    %119 = vector.extract_strided_slice %118 {offsets = [0, 0], sizes = [8, 128], strides = [1, 1]} : vector<8x512xf32> to vector<8x128xf32>
    %120 = arith.negf %119 : vector<8x128xf32>
    %121 = math.exp %120 : vector<8x128xf32>
    %cst_94 = arith.constant 1.000000e+00 : f32
    %122 = vector.broadcast %cst_94 : f32 to vector<8x128xf32>
    %123 = arith.addf %122, %121 : vector<8x128xf32>
    %124 = arith.divf %122, %123 : vector<8x128xf32>
    %125 = vector.extract_strided_slice %118 {offsets = [0, 128], sizes = [8, 128], strides = [1, 1]} : vector<8x512xf32> to vector<8x128xf32>
    %126 = arith.negf %125 : vector<8x128xf32>
    %127 = math.exp %126 : vector<8x128xf32>
    %cst_95 = arith.constant 1.000000e+00 : f32
    %128 = vector.broadcast %cst_95 : f32 to vector<8x128xf32>
    %129 = arith.addf %128, %127 : vector<8x128xf32>
    %130 = arith.divf %128, %129 : vector<8x128xf32>
    %131 = vector.extract_strided_slice %118 {offsets = [0, 256], sizes = [8, 128], strides = [1, 1]} : vector<8x512xf32> to vector<8x128xf32>
    %132 = math.tanh %131 : vector<8x128xf32>
    %133 = vector.extract_strided_slice %118 {offsets = [0, 384], sizes = [8, 128], strides = [1, 1]} : vector<8x512xf32> to vector<8x128xf32>
    %134 = arith.negf %133 : vector<8x128xf32>
    %135 = math.exp %134 : vector<8x128xf32>
    %cst_96 = arith.constant 1.000000e+00 : f32
    %136 = vector.broadcast %cst_96 : f32 to vector<8x128xf32>
    %137 = arith.addf %136, %135 : vector<8x128xf32>
    %138 = arith.divf %136, %137 : vector<8x128xf32>
    %139 = arith.mulf %130, %110 : vector<8x128xf32>
    %140 = arith.mulf %124, %132 : vector<8x128xf32>
    %141 = arith.addf %139, %140 : vector<8x128xf32>
    %142 = math.tanh %141 : vector<8x128xf32>
    %143 = arith.mulf %138, %142 : vector<8x128xf32>
    %c2_i32 = arith.constant 2 : i32
    %144 = arith.index_cast %c2_i32 : i32 to index
    %c0_97 = arith.constant 0 : index
    %c0_98 = arith.constant 0 : index
    %145 = vector.load %arg7[%144, %c0_97, %c0_98] : memref<8x8x512xf32, #tpu.memory_space<vmem>>, vector<1x8x512xf32>
    %146 = vector.shape_cast %145 : vector<1x8x512xf32> to vector<8x512xf32>
    %c0_99 = arith.constant 0 : index
    %c0_100 = arith.constant 0 : index
    %147 = vector.load %arg2[%c0_99, %c0_100] : memref<128x512xf32, #tpu.memory_space<vmem>>, vector<128x512xf32>
    %cst_101 = arith.constant dense<0.000000e+00> : vector<8x512xf32>
    %148 = tpu.matmul %143, %147, %cst_101 {dimension_numbers = #tpu.dot_dimension_numbers<[1], [0], [0], [1], [0, 0, 1, 1], [], []>} : vector<8x128xf32>, vector<128x512xf32>, vector<8x512xf32> -> vector<8x512xf32>
    %149 = arith.addf %146, %148 : vector<8x512xf32>
    %150 = vector.extract_strided_slice %149 {offsets = [0, 0], sizes = [8, 128], strides = [1, 1]} : vector<8x512xf32> to vector<8x128xf32>
    %151 = arith.negf %150 : vector<8x128xf32>
    %152 = math.exp %151 : vector<8x128xf32>
    %cst_102 = arith.constant 1.000000e+00 : f32
    %153 = vector.broadcast %cst_102 : f32 to vector<8x128xf32>
    %154 = arith.addf %153, %152 : vector<8x128xf32>
    %155 = arith.divf %153, %154 : vector<8x128xf32>
    %156 = vector.extract_strided_slice %149 {offsets = [0, 128], sizes = [8, 128], strides = [1, 1]} : vector<8x512xf32> to vector<8x128xf32>
    %157 = arith.negf %156 : vector<8x128xf32>
    %158 = math.exp %157 : vector<8x128xf32>
    %cst_103 = arith.constant 1.000000e+00 : f32
    %159 = vector.broadcast %cst_103 : f32 to vector<8x128xf32>
    %160 = arith.addf %159, %158 : vector<8x128xf32>
    %161 = arith.divf %159, %160 : vector<8x128xf32>
    %162 = vector.extract_strided_slice %149 {offsets = [0, 256], sizes = [8, 128], strides = [1, 1]} : vector<8x512xf32> to vector<8x128xf32>
    %163 = math.tanh %162 : vector<8x128xf32>
    %164 = vector.extract_strided_slice %149 {offsets = [0, 384], sizes = [8, 128], strides = [1, 1]} : vector<8x512xf32> to vector<8x128xf32>
    %165 = arith.negf %164 : vector<8x128xf32>
    %166 = math.exp %165 : vector<8x128xf32>
    %cst_104 = arith.constant 1.000000e+00 : f32
    %167 = vector.broadcast %cst_104 : f32 to vector<8x128xf32>
    %168 = arith.addf %167, %166 : vector<8x128xf32>
    %169 = arith.divf %167, %168 : vector<8x128xf32>
    %170 = arith.mulf %161, %141 : vector<8x128xf32>
    %171 = arith.mulf %155, %163 : vector<8x128xf32>
    %172 = arith.addf %170, %171 : vector<8x128xf32>
    %173 = math.tanh %172 : vector<8x128xf32>
    %174 = arith.mulf %169, %173 : vector<8x128xf32>
    %c3_i32 = arith.constant 3 : i32
    %175 = arith.index_cast %c3_i32 : i32 to index
    %c0_105 = arith.constant 0 : index
    %c0_106 = arith.constant 0 : index
    %176 = vector.load %arg7[%175, %c0_105, %c0_106] : memref<8x8x512xf32, #tpu.memory_space<vmem>>, vector<1x8x512xf32>
    %177 = vector.shape_cast %176 : vector<1x8x512xf32> to vector<8x512xf32>
    %c0_107 = arith.constant 0 : index
    %c0_108 = arith.constant 0 : index
    %178 = vector.load %arg2[%c0_107, %c0_108] : memref<128x512xf32, #tpu.memory_space<vmem>>, vector<128x512xf32>
    %cst_109 = arith.constant dense<0.000000e+00> : vector<8x512xf32>
    %179 = tpu.matmul %174, %178, %cst_109 {dimension_numbers = #tpu.dot_dimension_numbers<[1], [0], [0], [1], [0, 0, 1, 1], [], []>} : vector<8x128xf32>, vector<128x512xf32>, vector<8x512xf32> -> vector<8x512xf32>
    %180 = arith.addf %177, %179 : vector<8x512xf32>
    %181 = vector.extract_strided_slice %180 {offsets = [0, 0], sizes = [8, 128], strides = [1, 1]} : vector<8x512xf32> to vector<8x128xf32>
    %182 = arith.negf %181 : vector<8x128xf32>
    %183 = math.exp %182 : vector<8x128xf32>
    %cst_110 = arith.constant 1.000000e+00 : f32
    %184 = vector.broadcast %cst_110 : f32 to vector<8x128xf32>
    %185 = arith.addf %184, %183 : vector<8x128xf32>
    %186 = arith.divf %184, %185 : vector<8x128xf32>
    %187 = vector.extract_strided_slice %180 {offsets = [0, 128], sizes = [8, 128], strides = [1, 1]} : vector<8x512xf32> to vector<8x128xf32>
    %188 = arith.negf %187 : vector<8x128xf32>
    %189 = math.exp %188 : vector<8x128xf32>
    %cst_111 = arith.constant 1.000000e+00 : f32
    %190 = vector.broadcast %cst_111 : f32 to vector<8x128xf32>
    %191 = arith.addf %190, %189 : vector<8x128xf32>
    %192 = arith.divf %190, %191 : vector<8x128xf32>
    %193 = vector.extract_strided_slice %180 {offsets = [0, 256], sizes = [8, 128], strides = [1, 1]} : vector<8x512xf32> to vector<8x128xf32>
    %194 = math.tanh %193 : vector<8x128xf32>
    %195 = vector.extract_strided_slice %180 {offsets = [0, 384], sizes = [8, 128], strides = [1, 1]} : vector<8x512xf32> to vector<8x128xf32>
    %196 = arith.negf %195 : vector<8x128xf32>
    %197 = math.exp %196 : vector<8x128xf32>
    %cst_112 = arith.constant 1.000000e+00 : f32
    %198 = vector.broadcast %cst_112 : f32 to vector<8x128xf32>
    %199 = arith.addf %198, %197 : vector<8x128xf32>
    %200 = arith.divf %198, %199 : vector<8x128xf32>
    %201 = arith.mulf %192, %172 : vector<8x128xf32>
    %202 = arith.mulf %186, %194 : vector<8x128xf32>
    %203 = arith.addf %201, %202 : vector<8x128xf32>
    %204 = math.tanh %203 : vector<8x128xf32>
    %205 = arith.mulf %200, %204 : vector<8x128xf32>
    %c4_i32 = arith.constant 4 : i32
    %206 = arith.index_cast %c4_i32 : i32 to index
    %c0_113 = arith.constant 0 : index
    %c0_114 = arith.constant 0 : index
    %207 = vector.load %arg7[%206, %c0_113, %c0_114] : memref<8x8x512xf32, #tpu.memory_space<vmem>>, vector<1x8x512xf32>
    %208 = vector.shape_cast %207 : vector<1x8x512xf32> to vector<8x512xf32>
    %c0_115 = arith.constant 0 : index
    %c0_116 = arith.constant 0 : index
    %209 = vector.load %arg2[%c0_115, %c0_116] : memref<128x512xf32, #tpu.memory_space<vmem>>, vector<128x512xf32>
    %cst_117 = arith.constant dense<0.000000e+00> : vector<8x512xf32>
    %210 = tpu.matmul %205, %209, %cst_117 {dimension_numbers = #tpu.dot_dimension_numbers<[1], [0], [0], [1], [0, 0, 1, 1], [], []>} : vector<8x128xf32>, vector<128x512xf32>, vector<8x512xf32> -> vector<8x512xf32>
    %211 = arith.addf %208, %210 : vector<8x512xf32>
    %212 = vector.extract_strided_slice %211 {offsets = [0, 0], sizes = [8, 128], strides = [1, 1]} : vector<8x512xf32> to vector<8x128xf32>
    %213 = arith.negf %212 : vector<8x128xf32>
    %214 = math.exp %213 : vector<8x128xf32>
    %cst_118 = arith.constant 1.000000e+00 : f32
    %215 = vector.broadcast %cst_118 : f32 to vector<8x128xf32>
    %216 = arith.addf %215, %214 : vector<8x128xf32>
    %217 = arith.divf %215, %216 : vector<8x128xf32>
    %218 = vector.extract_strided_slice %211 {offsets = [0, 128], sizes = [8, 128], strides = [1, 1]} : vector<8x512xf32> to vector<8x128xf32>
    %219 = arith.negf %218 : vector<8x128xf32>
    %220 = math.exp %219 : vector<8x128xf32>
    %cst_119 = arith.constant 1.000000e+00 : f32
    %221 = vector.broadcast %cst_119 : f32 to vector<8x128xf32>
    %222 = arith.addf %221, %220 : vector<8x128xf32>
    %223 = arith.divf %221, %222 : vector<8x128xf32>
    %224 = vector.extract_strided_slice %211 {offsets = [0, 256], sizes = [8, 128], strides = [1, 1]} : vector<8x512xf32> to vector<8x128xf32>
    %225 = math.tanh %224 : vector<8x128xf32>
    %226 = vector.extract_strided_slice %211 {offsets = [0, 384], sizes = [8, 128], strides = [1, 1]} : vector<8x512xf32> to vector<8x128xf32>
    %227 = arith.negf %226 : vector<8x128xf32>
    %228 = math.exp %227 : vector<8x128xf32>
    %cst_120 = arith.constant 1.000000e+00 : f32
    %229 = vector.broadcast %cst_120 : f32 to vector<8x128xf32>
    %230 = arith.addf %229, %228 : vector<8x128xf32>
    %231 = arith.divf %229, %230 : vector<8x128xf32>
    %232 = arith.mulf %223, %203 : vector<8x128xf32>
    %233 = arith.mulf %217, %225 : vector<8x128xf32>
    %234 = arith.addf %232, %233 : vector<8x128xf32>
    %235 = math.tanh %234 : vector<8x128xf32>
    %236 = arith.mulf %231, %235 : vector<8x128xf32>
    %c5_i32 = arith.constant 5 : i32
    %237 = arith.index_cast %c5_i32 : i32 to index
    %c0_121 = arith.constant 0 : index
    %c0_122 = arith.constant 0 : index
    %238 = vector.load %arg7[%237, %c0_121, %c0_122] : memref<8x8x512xf32, #tpu.memory_space<vmem>>, vector<1x8x512xf32>
    %239 = vector.shape_cast %238 : vector<1x8x512xf32> to vector<8x512xf32>
    %c0_123 = arith.constant 0 : index
    %c0_124 = arith.constant 0 : index
    %240 = vector.load %arg2[%c0_123, %c0_124] : memref<128x512xf32, #tpu.memory_space<vmem>>, vector<128x512xf32>
    %cst_125 = arith.constant dense<0.000000e+00> : vector<8x512xf32>
    %241 = tpu.matmul %236, %240, %cst_125 {dimension_numbers = #tpu.dot_dimension_numbers<[1], [0], [0], [1], [0, 0, 1, 1], [], []>} : vector<8x128xf32>, vector<128x512xf32>, vector<8x512xf32> -> vector<8x512xf32>
    %242 = arith.addf %239, %241 : vector<8x512xf32>
    %243 = vector.extract_strided_slice %242 {offsets = [0, 0], sizes = [8, 128], strides = [1, 1]} : vector<8x512xf32> to vector<8x128xf32>
    %244 = arith.negf %243 : vector<8x128xf32>
    %245 = math.exp %244 : vector<8x128xf32>
    %cst_126 = arith.constant 1.000000e+00 : f32
    %246 = vector.broadcast %cst_126 : f32 to vector<8x128xf32>
    %247 = arith.addf %246, %245 : vector<8x128xf32>
    %248 = arith.divf %246, %247 : vector<8x128xf32>
    %249 = vector.extract_strided_slice %242 {offsets = [0, 128], sizes = [8, 128], strides = [1, 1]} : vector<8x512xf32> to vector<8x128xf32>
    %250 = arith.negf %249 : vector<8x128xf32>
    %251 = math.exp %250 : vector<8x128xf32>
    %cst_127 = arith.constant 1.000000e+00 : f32
    %252 = vector.broadcast %cst_127 : f32 to vector<8x128xf32>
    %253 = arith.addf %252, %251 : vector<8x128xf32>
    %254 = arith.divf %252, %253 : vector<8x128xf32>
    %255 = vector.extract_strided_slice %242 {offsets = [0, 256], sizes = [8, 128], strides = [1, 1]} : vector<8x512xf32> to vector<8x128xf32>
    %256 = math.tanh %255 : vector<8x128xf32>
    %257 = vector.extract_strided_slice %242 {offsets = [0, 384], sizes = [8, 128], strides = [1, 1]} : vector<8x512xf32> to vector<8x128xf32>
    %258 = arith.negf %257 : vector<8x128xf32>
    %259 = math.exp %258 : vector<8x128xf32>
    %cst_128 = arith.constant 1.000000e+00 : f32
    %260 = vector.broadcast %cst_128 : f32 to vector<8x128xf32>
    %261 = arith.addf %260, %259 : vector<8x128xf32>
    %262 = arith.divf %260, %261 : vector<8x128xf32>
    %263 = arith.mulf %254, %234 : vector<8x128xf32>
    %264 = arith.mulf %248, %256 : vector<8x128xf32>
    %265 = arith.addf %263, %264 : vector<8x128xf32>
    %266 = math.tanh %265 : vector<8x128xf32>
    %267 = arith.mulf %262, %266 : vector<8x128xf32>
    %c6_i32 = arith.constant 6 : i32
    %268 = arith.index_cast %c6_i32 : i32 to index
    %c0_129 = arith.constant 0 : index
    %c0_130 = arith.constant 0 : index
    %269 = vector.load %arg7[%268, %c0_129, %c0_130] : memref<8x8x512xf32, #tpu.memory_space<vmem>>, vector<1x8x512xf32>
    %270 = vector.shape_cast %269 : vector<1x8x512xf32> to vector<8x512xf32>
    %c0_131 = arith.constant 0 : index
    %c0_132 = arith.constant 0 : index
    %271 = vector.load %arg2[%c0_131, %c0_132] : memref<128x512xf32, #tpu.memory_space<vmem>>, vector<128x512xf32>
    %cst_133 = arith.constant dense<0.000000e+00> : vector<8x512xf32>
    %272 = tpu.matmul %267, %271, %cst_133 {dimension_numbers = #tpu.dot_dimension_numbers<[1], [0], [0], [1], [0, 0, 1, 1], [], []>} : vector<8x128xf32>, vector<128x512xf32>, vector<8x512xf32> -> vector<8x512xf32>
    %273 = arith.addf %270, %272 : vector<8x512xf32>
    %274 = vector.extract_strided_slice %273 {offsets = [0, 0], sizes = [8, 128], strides = [1, 1]} : vector<8x512xf32> to vector<8x128xf32>
    %275 = arith.negf %274 : vector<8x128xf32>
    %276 = math.exp %275 : vector<8x128xf32>
    %cst_134 = arith.constant 1.000000e+00 : f32
    %277 = vector.broadcast %cst_134 : f32 to vector<8x128xf32>
    %278 = arith.addf %277, %276 : vector<8x128xf32>
    %279 = arith.divf %277, %278 : vector<8x128xf32>
    %280 = vector.extract_strided_slice %273 {offsets = [0, 128], sizes = [8, 128], strides = [1, 1]} : vector<8x512xf32> to vector<8x128xf32>
    %281 = arith.negf %280 : vector<8x128xf32>
    %282 = math.exp %281 : vector<8x128xf32>
    %cst_135 = arith.constant 1.000000e+00 : f32
    %283 = vector.broadcast %cst_135 : f32 to vector<8x128xf32>
    %284 = arith.addf %283, %282 : vector<8x128xf32>
    %285 = arith.divf %283, %284 : vector<8x128xf32>
    %286 = vector.extract_strided_slice %273 {offsets = [0, 256], sizes = [8, 128], strides = [1, 1]} : vector<8x512xf32> to vector<8x128xf32>
    %287 = math.tanh %286 : vector<8x128xf32>
    %288 = vector.extract_strided_slice %273 {offsets = [0, 384], sizes = [8, 128], strides = [1, 1]} : vector<8x512xf32> to vector<8x128xf32>
    %289 = arith.negf %288 : vector<8x128xf32>
    %290 = math.exp %289 : vector<8x128xf32>
    %cst_136 = arith.constant 1.000000e+00 : f32
    %291 = vector.broadcast %cst_136 : f32 to vector<8x128xf32>
    %292 = arith.addf %291, %290 : vector<8x128xf32>
    %293 = arith.divf %291, %292 : vector<8x128xf32>
    %294 = arith.mulf %285, %265 : vector<8x128xf32>
    %295 = arith.mulf %279, %287 : vector<8x128xf32>
    %296 = arith.addf %294, %295 : vector<8x128xf32>
    %297 = math.tanh %296 : vector<8x128xf32>
    %298 = arith.mulf %293, %297 : vector<8x128xf32>
    %c7_i32 = arith.constant 7 : i32
    %299 = arith.index_cast %c7_i32 : i32 to index
    %c0_137 = arith.constant 0 : index
    %c0_138 = arith.constant 0 : index
    %300 = vector.load %arg7[%299, %c0_137, %c0_138] : memref<8x8x512xf32, #tpu.memory_space<vmem>>, vector<1x8x512xf32>
    %301 = vector.shape_cast %300 : vector<1x8x512xf32> to vector<8x512xf32>
    %c0_139 = arith.constant 0 : index
    %c0_140 = arith.constant 0 : index
    %302 = vector.load %arg2[%c0_139, %c0_140] : memref<128x512xf32, #tpu.memory_space<vmem>>, vector<128x512xf32>
    %cst_141 = arith.constant dense<0.000000e+00> : vector<8x512xf32>
    %303 = tpu.matmul %298, %302, %cst_141 {dimension_numbers = #tpu.dot_dimension_numbers<[1], [0], [0], [1], [0, 0, 1, 1], [], []>} : vector<8x128xf32>, vector<128x512xf32>, vector<8x512xf32> -> vector<8x512xf32>
    %304 = arith.addf %301, %303 : vector<8x512xf32>
    %305 = vector.extract_strided_slice %304 {offsets = [0, 0], sizes = [8, 128], strides = [1, 1]} : vector<8x512xf32> to vector<8x128xf32>
    %306 = arith.negf %305 : vector<8x128xf32>
    %307 = math.exp %306 : vector<8x128xf32>
    %cst_142 = arith.constant 1.000000e+00 : f32
    %308 = vector.broadcast %cst_142 : f32 to vector<8x128xf32>
    %309 = arith.addf %308, %307 : vector<8x128xf32>
    %310 = arith.divf %308, %309 : vector<8x128xf32>
    %311 = vector.extract_strided_slice %304 {offsets = [0, 128], sizes = [8, 128], strides = [1, 1]} : vector<8x512xf32> to vector<8x128xf32>
    %312 = arith.negf %311 : vector<8x128xf32>
    %313 = math.exp %312 : vector<8x128xf32>
    %cst_143 = arith.constant 1.000000e+00 : f32
    %314 = vector.broadcast %cst_143 : f32 to vector<8x128xf32>
    %315 = arith.addf %314, %313 : vector<8x128xf32>
    %316 = arith.divf %314, %315 : vector<8x128xf32>
    %317 = vector.extract_strided_slice %304 {offsets = [0, 256], sizes = [8, 128], strides = [1, 1]} : vector<8x512xf32> to vector<8x128xf32>
    %318 = math.tanh %317 : vector<8x128xf32>
    %319 = vector.extract_strided_slice %304 {offsets = [0, 384], sizes = [8, 128], strides = [1, 1]} : vector<8x512xf32> to vector<8x128xf32>
    %320 = arith.negf %319 : vector<8x128xf32>
    %321 = math.exp %320 : vector<8x128xf32>
    %cst_144 = arith.constant 1.000000e+00 : f32
    %322 = vector.broadcast %cst_144 : f32 to vector<8x128xf32>
    %323 = arith.addf %322, %321 : vector<8x128xf32>
    %324 = arith.divf %322, %323 : vector<8x128xf32>
    %325 = arith.mulf %316, %296 : vector<8x128xf32>
    %326 = arith.mulf %310, %318 : vector<8x128xf32>
    %327 = arith.addf %325, %326 : vector<8x128xf32>
    %328 = math.tanh %327 : vector<8x128xf32>
    %329 = arith.mulf %324, %328 : vector<8x128xf32>
    %c8_i32 = arith.constant 8 : i32
    %c0_145 = arith.constant 0 : index
    %c0_146 = arith.constant 0 : index
    %330 = vector.load %arg4[%c0_145, %c0_146] : memref<128x128xf32, #tpu.memory_space<vmem>>, vector<128x128xf32>
    %cst_147 = arith.constant dense<0.000000e+00> : vector<8x128xf32>
    %331 = tpu.matmul %329, %330, %cst_147 {dimension_numbers = #tpu.dot_dimension_numbers<[1], [0], [0], [1], [0, 0, 1, 1], [], []>} : vector<8x128xf32>, vector<128x128xf32>, vector<8x128xf32> -> vector<8x128xf32>
    %c0_148 = arith.constant 0 : index
    %c0_149 = arith.constant 0 : index
    %332 = vector.load %arg5[%c0_148, %c0_149] : memref<1x128xf32, #tpu.memory_space<vmem>>, vector<1x128xf32>
    %333 = vector.broadcast %332 : vector<1x128xf32> to vector<8x128xf32>
    %334 = arith.addf %331, %333 : vector<8x128xf32>
    %c0_150 = arith.constant 0 : index
    %c0_151 = arith.constant 0 : index
    %335 = vector.load %arg6[%c0_150, %c0_151] : memref<8x128xf32, #tpu.memory_space<vmem>>, vector<8x128xf32>
    tpu.vector_store %arg6[%c0_150, %c0_151], %334 {strides = array<i32>} : memref<8x128xf32, #tpu.memory_space<vmem>>, vector<8x128xf32>,
    return
  }
}

</mosaic_0001>

<llo_original>
// kernel: recurrent_neural_network_forward.1
$region0: #{recurrent_neural_network_forward.1}
  #allocation0 [shape = 'u32[]', space=smem, size = 0x4, offset = 0x4, fixed_abs, tag = 'smem constant byte address 0x4 - core index']
  #allocation1 [shape = 'u32[72,128]{1,0:T(1,128)}', space=vmem, size = 0x9000, scoped, tag = 'internal scratch']
  #allocation2 [shape = 'f32[8,8,512]{2,1,0:T(8,128)}', space=vmem, size = 0x20000, scoped, tag = 'scratch operand']
  %s0 = inlined_call_operand.vmem [shape: f32[8,8,16], index: 0, kind: input, shape index: {}]
  %s1 = inlined_call_operand.vmem [shape: f32[16,512], index: 1, kind: input, shape index: {}]
  %s2 = inlined_call_operand.vmem [shape: f32[128,512], index: 2, kind: input, shape index: {}]
  %s3 = inlined_call_operand.vmem [shape: f32[1,512], index: 3, kind: input, shape index: {}]
  %s4 = inlined_call_operand.vmem [shape: f32[128,128], index: 4, kind: input, shape index: {}]
  %s5 = inlined_call_operand.vmem [shape: f32[1,128], index: 5, kind: input, shape index: {}]
  %s6 = inlined_call_operand.vmem [shape: f32[8,128], index: 6, kind: output, shape index: {}]
  %s7 = sld [smem:[#allocation0]]
  $region34: #{recurrent_neural_network_forward.1} parent=0
    _
  %s9 = ssub.s32 1, %s7
  %s10 = scalar_select 0, %s9, %s7
  // Predicated region
  $region2: #{recurrent_neural_network_forward.1} parent=0 // pred_check
    _
  $region3: #{recurrent_neural_network_forward.1} parent=0 // pred_check_branch
    %12 = sbr.rel (0) target = $region5
  $region4: #{recurrent_neural_network_forward.1} parent=0 // pred_region
    _
  $region5: #{recurrent_neural_network_forward.1} parent=0 // pred_fallthru
    _
  // Predicated region
  $region6: #{recurrent_neural_network_forward.1} parent=0 // pred_check
    _
  $region7: #{recurrent_neural_network_forward.1} parent=0 // pred_check_branch
    %14 = sbr.rel (0) target = $region9
  $region8: #{recurrent_neural_network_forward.1} parent=0 // pred_region
    _
  $region9: #{recurrent_neural_network_forward.1} parent=0 // pred_fallthru
    _
  // Predicated region
  $region10: #{recurrent_neural_network_forward.1} parent=0 // pred_check
    _
  $region11: #{recurrent_neural_network_forward.1} parent=0 // pred_check_branch
    %16 = sbr.rel (0) target = $region13
  $region12: #{recurrent_neural_network_forward.1} parent=0 // pred_region
    _
  $region13: #{recurrent_neural_network_forward.1} parent=0 // pred_fallthru
    _
  // Predicated region
  $region14: #{recurrent_neural_network_forward.1} parent=0 // pred_check
    _
  $region15: #{recurrent_neural_network_forward.1} parent=0 // pred_check_branch
    %18 = sbr.rel (0) target = $region17
  $region16: #{recurrent_neural_network_forward.1} parent=0 // pred_region
    _
  $region17: #{recurrent_neural_network_forward.1} parent=0 // pred_fallthru
    _
  // Predicated region
  $region18: #{recurrent_neural_network_forward.1} parent=0 // pred_check
    _
  $region19: #{recurrent_neural_network_forward.1} parent=0 // pred_check_branch
    %20 = sbr.rel (0) target = $region21
  $region20: #{recurrent_neural_network_forward.1} parent=0 // pred_region
    _
  $region21: #{recurrent_neural_network_forward.1} parent=0 // pred_fallthru
    _
  // Predicated region
  $region22: #{recurrent_neural_network_forward.1} parent=0 // pred_check
    _
  $region23: #{recurrent_neural_network_forward.1} parent=0 // pred_check_branch
    %22 = sbr.rel (0) target = $region25
  $region24: #{recurrent_neural_network_forward.1} parent=0 // pred_region
    _
  $region25: #{recurrent_neural_network_forward.1} parent=0 // pred_fallthru
    _
  %v23 = vld [vmem:[%s0] sm:$0xff]
  %v24 = vld [vmem:[%s1] sm:$0xff]
  %v25 = vld [vmem:[%s1 + $0x8] sm:$0xff]
  %v26 = vld [vmem:[%s1 + $0x10] sm:$0xff]
  %v27 = vld [vmem:[%s1 + $0x18] sm:$0xff]
  %v28 = vld [vmem:[%s1 + $0x20] sm:$0xff]
  %v29 = vld [vmem:[%s1 + $0x28] sm:$0xff]
  %v30 = vld [vmem:[%s1 + $0x30] sm:$0xff]
  %v31 = vld [vmem:[%s1 + $0x38] sm:$0xff]
  %v32 = vld [vmem:[%s3] sm:$0xf]
  %v34 = vperm.slane %v32, 0
  %v35 = vperm.slane %v32, 1
  %v36 = vperm.slane %v32, 2
  %v37 = vperm.slane %v32, 3
  %vm42 = vcmask 130048
  %v44 = vsel %vm42, %v23, 0
  %46 = vmatpush.msra.mxu0 0.0
  %47 = vmatpush.msra.mxu0 0.0
  %48 = vmatpush.msra.mxu0 0.0
  %49 = vmatpush.msra.mxu0 0.0
  %50 = vmatpush.msra.mxu0 0.0
  %51 = vmatpush.msra.mxu0 0.0
  %52 = vmatpush.msra.mxu0 0.0
  %53 = vmatpush.msra.mxu0 0.0
  %54 = vmatpush.msra.mxu0 0.0
  %55 = vmatpush.msra.mxu0 0.0
  %56 = vmatpush.msra.mxu0 0.0
  %57 = vmatpush.msra.mxu0 0.0
  %58 = vmatpush.msra.mxu0 0.0
  %59 = vmatpush.msra.mxu0 0.0
  %60 = vmatpush.msra.mxu0 %v28
  %61 = vmatpush.msra.mxu0 %v24
  %62 = vmatmul.f32.gmra.mxu0 %v44
  %v63 = vpop.f32.mrf.mxu0
  %v64 = vadd.f32 %v34, %v63
  %65 = vdwg.mxu0
  %66 = vmatpush.msra.mxu0 0.0
  %67 = vmatpush.msra.mxu0 0.0
  %68 = vmatpush.msra.mxu0 0.0
  %69 = vmatpush.msra.mxu0 0.0
  %70 = vmatpush.msra.mxu0 0.0
  %71 = vmatpush.msra.mxu0 0.0
  %72 = vmatpush.msra.mxu0 0.0
  %73 = vmatpush.msra.mxu0 0.0
  %74 = vmatpush.msra.mxu0 0.0
  %75 = vmatpush.msra.mxu0 0.0
  %76 = vmatpush.msra.mxu0 0.0
  %77 = vmatpush.msra.mxu0 0.0
  %78 = vmatpush.msra.mxu0 0.0
  %79 = vmatpush.msra.mxu0 0.0
  %80 = vmatpush.msra.mxu0 %v29
  %81 = vmatpush.msra.mxu0 %v25
  %82 = vmatmul.f32.gmra.mxu0 %v44
  %v83 = vpop.f32.mrf.mxu0
  %v84 = vadd.f32 %v35, %v83
  %85 = vdwg.mxu0
  %86 = vmatpush.msra.mxu0 0.0
  %87 = vmatpush.msra.mxu0 0.0
  %88 = vmatpush.msra.mxu0 0.0
  %89 = vmatpush.msra.mxu0 0.0
  %90 = vmatpush.msra.mxu0 0.0
  %91 = vmatpush.msra.mxu0 0.0
  %92 = vmatpush.msra.mxu0 0.0
  %93 = vmatpush.msra.mxu0 0.0
  %94 = vmatpush.msra.mxu0 0.0
  %95 = vmatpush.msra.mxu0 0.0
  %96 = vmatpush.msra.mxu0 0.0
  %97 = vmatpush.msra.mxu0 0.0
  %98 = vmatpush.msra.mxu0 0.0
  %99 = vmatpush.msra.mxu0 0.0
  %100 = vmatpush.msra.mxu0 %v30
  %101 = vmatpush.msra.mxu0 %v26
  %102 = vmatmul.f32.gmra.mxu0 %v44
  %v103 = vpop.f32.mrf.mxu0
  %v104 = vadd.f32 %v36, %v103
  %105 = vdwg.mxu0
  %106 = vmatpush.msra.mxu0 0.0
  %107 = vmatpush.msra.mxu0 0.0
  %108 = vmatpush.msra.mxu0 0.0
  %109 = vmatpush.msra.mxu0 0.0
  %110 = vmatpush.msra.mxu0 0.0
  %111 = vmatpush.msra.mxu0 0.0
  %112 = vmatpush.msra.mxu0 0.0
  %113 = vmatpush.msra.mxu0 0.0
  %114 = vmatpush.msra.mxu0 0.0
  %115 = vmatpush.msra.mxu0 0.0
  %116 = vmatpush.msra.mxu0 0.0
  %117 = vmatpush.msra.mxu0 0.0
  %118 = vmatpush.msra.mxu0 0.0
  %119 = vmatpush.msra.mxu0 0.0
  %120 = vmatpush.msra.mxu0 %v31
  %121 = vmatpush.msra.mxu0 %v27
  %122 = vmatmul.f32.gmra.mxu0 %v44
  %v123 = vpop.f32.mrf.mxu0
  %v124 = vadd.f32 %v37, %v123
  %125 = vdwg.mxu0
  %126 = vst [vmem:[#allocation2] sm:$0xff] %v64
  %127 = vst [vmem:[#allocation2 + $0x8] sm:$0xff] %v84
  %128 = vst [vmem:[#allocation2 + $0x10] sm:$0xff] %v104
  %129 = vst [vmem:[#allocation2 + $0x18] sm:$0xff] %v124
  %s130 = scalar_lea.vmem %s0, 8
  %v131 = vld [vmem:[%s130] sm:$0xff]
  %v132 = vld [vmem:[%s1] sm:$0xff]
  %v133 = vld [vmem:[%s1 + $0x8] sm:$0xff]
  %v134 = vld [vmem:[%s1 + $0x10] sm:$0xff]
  %v135 = vld [vmem:[%s1 + $0x18] sm:$0xff]
  %v136 = vld [vmem:[%s1 + $0x20] sm:$0xff]
  %v137 = vld [vmem:[%s1 + $0x28] sm:$0xff]
  %v138 = vld [vmem:[%s1 + $0x30] sm:$0xff]
  %v139 = vld [vmem:[%s1 + $0x38] sm:$0xff]
  %v140 = vld [vmem:[%s3] sm:$0xf]
  %v142 = vperm.slane %v140, 0
  %v143 = vperm.slane %v140, 1
  %v144 = vperm.slane %v140, 2
  %v145 = vperm.slane %v140, 3
  %v151 = vsel %vm42, %v131, 0
  %153 = vmatpush.msra.mxu0 0.0
  %154 = vmatpush.msra.mxu0 0.0
  %155 = vmatpush.msra.mxu0 0.0
  %156 = vmatpush.msra.mxu0 0.0
  %157 = vmatpush.msra.mxu0 0.0
  %158 = vmatpush.msra.mxu0 0.0
  %159 = vmatpush.msra.mxu0 0.0
  %160 = vmatpush.msra.mxu0 0.0
  %161 = vmatpush.msra.mxu0 0.0
  %162 = vmatpush.msra.mxu0 0.0
  %163 = vmatpush.msra.mxu0 0.0
  %164 = vmatpush.msra.mxu0 0.0
  %165 = vmatpush.msra.mxu0 0.0
  %166 = vmatpush.msra.mxu0 0.0
  %167 = vmatpush.msra.mxu0 %v136
  %168 = vmatpush.msra.mxu0 %v132
  %169 = vmatmul.f32.gmra.mxu0 %v151
  %v170 = vpop.f32.mrf.mxu0
  %v171 = vadd.f32 %v142, %v170
  %172 = vdwg.mxu0
  %173 = vmatpush.msra.mxu0 0.0
  %174 = vmatpush.msra.mxu0 0.0
  %175 = vmatpush.msra.mxu0 0.0
  %176 = vmatpush.msra.mxu0 0.0
  %177 = vmatpush.msra.mxu0 0.0
  %178 = vmatpush.msra.mxu0 0.0
  %179 = vmatpush.msra.mxu0 0.0
  %180 = vmatpush.msra.mxu0 0.0
  %181 = vmatpush.msra.mxu0 0.0
  %182 = vmatpush.msra.mxu0 0.0
  %183 = vmatpush.msra.mxu0 0.0
  %184 = vmatpush.msra.mxu0 0.0
  %185 = vmatpush.msra.mxu0 0.0
  %186 = vmatpush.msra.mxu0 0.0
  %187 = vmatpush.msra.mxu0 %v137
  %188 = vmatpush.msra.mxu0 %v133
  %189 = vmatmul.f32.gmra.mxu0 %v151
  %v190 = vpop.f32.mrf.mxu0
  %v191 = vadd.f32 %v143, %v190
  %192 = vdwg.mxu0
  %193 = vmatpush.msra.mxu0 0.0
  %194 = vmatpush.msra.mxu0 0.0
  %195 = vmatpush.msra.mxu0 0.0
  %196 = vmatpush.msra.mxu0 0.0
  %197 = vmatpush.msra.mxu0 0.0
  %198 = vmatpush.msra.mxu0 0.0
  %199 = vmatpush.msra.mxu0 0.0
  %200 = vmatpush.msra.mxu0 0.0
  %201 = vmatpush.msra.mxu0 0.0
  %202 = vmatpush.msra.mxu0 0.0
  %203 = vmatpush.msra.mxu0 0.0
  %204 = vmatpush.msra.mxu0 0.0
  %205 = vmatpush.msra.mxu0 0.0
  %206 = vmatpush.msra.mxu0 0.0
  %207 = vmatpush.msra.mxu0 %v138
  %208 = vmatpush.msra.mxu0 %v134
  %209 = vmatmul.f32.gmra.mxu0 %v151
  %v210 = vpop.f32.mrf.mxu0
  %v211 = vadd.f32 %v144, %v210
  %212 = vdwg.mxu0
  %213 = vmatpush.msra.mxu0 0.0
  %214 = vmatpush.msra.mxu0 0.0
  %215 = vmatpush.msra.mxu0 0.0
  %216 = vmatpush.msra.mxu0 0.0
  %217 = vmatpush.msra.mxu0 0.0
  %218 = vmatpush.msra.mxu0 0.0
  %219 = vmatpush.msra.mxu0 0.0
  %220 = vmatpush.msra.mxu0 0.0
  %221 = vmatpush.msra.mxu0 0.0
  %222 = vmatpush.msra.mxu0 0.0
  %223 = vmatpush.msra.mxu0 0.0
  %224 = vmatpush.msra.mxu0 0.0
  %225 = vmatpush.msra.mxu0 0.0
  %226 = vmatpush.msra.mxu0 0.0
  %227 = vmatpush.msra.mxu0 %v139
  %228 = vmatpush.msra.mxu0 %v135
  %229 = vmatmul.f32.gmra.mxu0 %v151
  %v230 = vpop.f32.mrf.mxu0
  %v231 = vadd.f32 %v145, %v230
  %232 = vdwg.mxu0
  %s233 = scalar_lea.vmem [#allocation2], 32
  %234 = vst [vmem:[%s233] sm:$0xff] %v171
  %235 = vst [vmem:[%s233 + $0x8] sm:$0xff] %v191
  %236 = vst [vmem:[%s233 + $0x10] sm:$0xff] %v211
  %237 = vst [vmem:[%s233 + $0x18] sm:$0xff] %v231
  %s238 = scalar_lea.vmem %s0, 16
  %v239 = vld [vmem:[%s238] sm:$0xff]
  %v240 = vld [vmem:[%s1] sm:$0xff]
  %v241 = vld [vmem:[%s1 + $0x8] sm:$0xff]
  %v242 = vld [vmem:[%s1 + $0x10] sm:$0xff]
  %v243 = vld [vmem:[%s1 + $0x18] sm:$0xff]
  %v244 = vld [vmem:[%s1 + $0x20] sm:$0xff]
  %v245 = vld [vmem:[%s1 + $0x28] sm:$0xff]
  %v246 = vld [vmem:[%s1 + $0x30] sm:$0xff]
  %v247 = vld [vmem:[%s1 + $0x38] sm:$0xff]
  %v248 = vld [vmem:[%s3] sm:$0xf]
  %v250 = vperm.slane %v248, 0
  %v251 = vperm.slane %v248, 1
  %v252 = vperm.slane %v248, 2
  %v253 = vperm.slane %v248, 3
  %v259 = vsel %vm42, %v239, 0
  %261 = vmatpush.msra.mxu0 0.0
  %262 = vmatpush.msra.mxu0 0.0
  %263 = vmatpush.msra.mxu0 0.0
  %264 = vmatpush.msra.mxu0 0.0
  %265 = vmatpush.msra.mxu0 0.0
  %266 = vmatpush.msra.mxu0 0.0
  %267 = vmatpush.msra.mxu0 0.0
  %268 = vmatpush.msra.mxu0 0.0
  %269 = vmatpush.msra.mxu0 0.0
  %270 = vmatpush.msra.mxu0 0.0
  %271 = vmatpush.msra.mxu0 0.0
  %272 = vmatpush.msra.mxu0 0.0
  %273 = vmatpush.msra.mxu0 0.0
  %274 = vmatpush.msra.mxu0 0.0
  %275 = vmatpush.msra.mxu0 %v244
  %276 = vmatpush.msra.mxu0 %v240
  %277 = vmatmul.f32.gmra.mxu0 %v259
  %v278 = vpop.f32.mrf.mxu0
  %v279 = vadd.f32 %v250, %v278
  %280 = vdwg.mxu0
  %281 = vmatpush.msra.mxu0 0.0
  %282 = vmatpush.msra.mxu0 0.0
  %283 = vmatpush.msra.mxu0 0.0
  %284 = vmatpush.msra.mxu0 0.0
  %285 = vmatpush.msra.mxu0 0.0
  %286 = vmatpush.msra.mxu0 0.0
  %287 = vmatpush.msra.mxu0 0.0
  %288 = vmatpush.msra.mxu0 0.0
  %289 = vmatpush.msra.mxu0 0.0
  %290 = vmatpush.msra.mxu0 0.0
  %291 = vmatpush.msra.mxu0 0.0
  %292 = vmatpush.msra.mxu0 0.0
  %293 = vmatpush.msra.mxu0 0.0
  %294 = vmatpush.msra.mxu0 0.0
  %295 = vmatpush.msra.mxu0 %v245
  %296 = vmatpush.msra.mxu0 %v241
  %297 = vmatmul.f32.gmra.mxu0 %v259
  %v298 = vpop.f32.mrf.mxu0
  %v299 = vadd.f32 %v251, %v298
  %300 = vdwg.mxu0
  %301 = vmatpush.msra.mxu0 0.0
  %302 = vmatpush.msra.mxu0 0.0
  %303 = vmatpush.msra.mxu0 0.0
  %304 = vmatpush.msra.mxu0 0.0
  %305 = vmatpush.msra.mxu0 0.0
  %306 = vmatpush.msra.mxu0 0.0
  %307 = vmatpush.msra.mxu0 0.0
  %308 = vmatpush.msra.mxu0 0.0
  %309 = vmatpush.msra.mxu0 0.0
  %310 = vmatpush.msra.mxu0 0.0
  %311 = vmatpush.msra.mxu0 0.0
  %312 = vmatpush.msra.mxu0 0.0
  %313 = vmatpush.msra.mxu0 0.0
  %314 = vmatpush.msra.mxu0 0.0
  %315 = vmatpush.msra.mxu0 %v246
  %316 = vmatpush.msra.mxu0 %v242
  %317 = vmatmul.f32.gmra.mxu0 %v259
  %v318 = vpop.f32.mrf.mxu0
  %v319 = vadd.f32 %v252, %v318
  %320 = vdwg.mxu0
  %321 = vmatpush.msra.mxu0 0.0
  %322 = vmatpush.msra.mxu0 0.0
  %323 = vmatpush.msra.mxu0 0.0
  %324 = vmatpush.msra.mxu0 0.0
  %325 = vmatpush.msra.mxu0 0.0
  %326 = vmatpush.msra.mxu0 0.0
  %327 = vmatpush.msra.mxu0 0.0
  %328 = vmatpush.msra.mxu0 0.0
  %329 = vmatpush.msra.mxu0 0.0
  %330 = vmatpush.msra.mxu0 0.0
  %331 = vmatpush.msra.mxu0 0.0
  %332 = vmatpush.msra.mxu0 0.0
  %333 = vmatpush.msra.mxu0 0.0
  %334 = vmatpush.msra.mxu0 0.0
  %335 = vmatpush.msra.mxu0 %v247
  %336 = vmatpush.msra.mxu0 %v243
  %337 = vmatmul.f32.gmra.mxu0 %v259
  %v338 = vpop.f32.mrf.mxu0
  %v339 = vadd.f32 %v253, %v338
  %340 = vdwg.mxu0
  %s341 = scalar_lea.vmem [#allocation2], 64
  %342 = vst [vmem:[%s341] sm:$0xff] %v279
  %343 = vst [vmem:[%s341 + $0x8] sm:$0xff] %v299
  %344 = vst [vmem:[%s341 + $0x10] sm:$0xff] %v319
  %345 = vst [vmem:[%s341 + $0x18] sm:$0xff] %v339
  %s346 = scalar_lea.vmem %s0, 24
  %v347 = vld [vmem:[%s346] sm:$0xff]
  %v348 = vld [vmem:[%s1] sm:$0xff]
  %v349 = vld [vmem:[%s1 + $0x8] sm:$0xff]
  %v350 = vld [vmem:[%s1 + $0x10] sm:$0xff]
  %v351 = vld [vmem:[%s1 + $0x18] sm:$0xff]
  %v352 = vld [vmem:[%s1 + $0x20] sm:$0xff]
  %v353 = vld [vmem:[%s1 + $0x28] sm:$0xff]
  %v354 = vld [vmem:[%s1 + $0x30] sm:$0xff]
  %v355 = vld [vmem:[%s1 + $0x38] sm:$0xff]
  %v356 = vld [vmem:[%s3] sm:$0xf]
  %v358 = vperm.slane %v356, 0
  %v359 = vperm.slane %v356, 1
  %v360 = vperm.slane %v356, 2
  %v361 = vperm.slane %v356, 3
  %v367 = vsel %vm42, %v347, 0
  %369 = vmatpush.msra.mxu0 0.0
  %370 = vmatpush.msra.mxu0 0.0
  %371 = vmatpush.msra.mxu0 0.0
  %372 = vmatpush.msra.mxu0 0.0
  %373 = vmatpush.msra.mxu0 0.0
  %374 = vmatpush.msra.mxu0 0.0
  %375 = vmatpush.msra.mxu0 0.0
  %376 = vmatpush.msra.mxu0 0.0
  %377 = vmatpush.msra.mxu0 0.0
  %378 = vmatpush.msra.mxu0 0.0
  %379 = vmatpush.msra.mxu0 0.0
  %380 = vmatpush.msra.mxu0 0.0
  %381 = vmatpush.msra.mxu0 0.0
  %382 = vmatpush.msra.mxu0 0.0
  %383 = vmatpush.msra.mxu0 %v352
  %384 = vmatpush.msra.mxu0 %v348
  %385 = vmatmul.f32.gmra.mxu0 %v367
  %v386 = vpop.f32.mrf.mxu0
  %v387 = vadd.f32 %v358, %v386
  %388 = vdwg.mxu0
  %389 = vmatpush.msra.mxu0 0.0
  %390 = vmatpush.msra.mxu0 0.0
  %391 = vmatpush.msra.mxu0 0.0
  %392 = vmatpush.msra.mxu0 0.0
  %393 = vmatpush.msra.mxu0 0.0
  %394 = vmatpush.msra.mxu0 0.0
  %395 = vmatpush.msra.mxu0 0.0
  %396 = vmatpush.msra.mxu0 0.0
  %397 = vmatpush.msra.mxu0 0.0
  %398 = vmatpush.msra.mxu0 0.0
  %399 = vmatpush.msra.mxu0 0.0
  %400 = vmatpush.msra.mxu0 0.0
  %401 = vmatpush.msra.mxu0 0.0
  %402 = vmatpush.msra.mxu0 0.0
  %403 = vmatpush.msra.mxu0 %v353
  %404 = vmatpush.msra.mxu0 %v349
  %405 = vmatmul.f32.gmra.mxu0 %v367
  %v406 = vpop.f32.mrf.mxu0
  %v407 = vadd.f32 %v359, %v406
  %408 = vdwg.mxu0
  %409 = vmatpush.msra.mxu0 0.0
  %410 = vmatpush.msra.mxu0 0.0
  %411 = vmatpush.msra.mxu0 0.0
  %412 = vmatpush.msra.mxu0 0.0
  %413 = vmatpush.msra.mxu0 0.0
  %414 = vmatpush.msra.mxu0 0.0
  %415 = vmatpush.msra.mxu0 0.0
  %416 = vmatpush.msra.mxu0 0.0
  %417 = vmatpush.msra.mxu0 0.0
  %418 = vmatpush.msra.mxu0 0.0
  %419 = vmatpush.msra.mxu0 0.0
  %420 = vmatpush.msra.mxu0 0.0
  %421 = vmatpush.msra.mxu0 0.0
  %422 = vmatpush.msra.mxu0 0.0
  %423 = vmatpush.msra.mxu0 %v354
  %424 = vmatpush.msra.mxu0 %v350
  %425 = vmatmul.f32.gmra.mxu0 %v367
  %v426 = vpop.f32.mrf.mxu0
  %v427 = vadd.f32 %v360, %v426
  %428 = vdwg.mxu0
  %429 = vmatpush.msra.mxu0 0.0
  %430 = vmatpush.msra.mxu0 0.0
  %431 = vmatpush.msra.mxu0 0.0
  %432 = vmatpush.msra.mxu0 0.0
  %433 = vmatpush.msra.mxu0 0.0
  %434 = vmatpush.msra.mxu0 0.0
  %435 = vmatpush.msra.mxu0 0.0
  %436 = vmatpush.msra.mxu0 0.0
  %437 = vmatpush.msra.mxu0 0.0
  %438 = vmatpush.msra.mxu0 0.0
  %439 = vmatpush.msra.mxu0 0.0
  %440 = vmatpush.msra.mxu0 0.0
  %441 = vmatpush.msra.mxu0 0.0
  %442 = vmatpush.msra.mxu0 0.0
  %443 = vmatpush.msra.mxu0 %v355
  %444 = vmatpush.msra.mxu0 %v351
  %445 = vmatmul.f32.gmra.mxu0 %v367
  %v446 = vpop.f32.mrf.mxu0
  %v447 = vadd.f32 %v361, %v446
  %448 = vdwg.mxu0
  %s449 = scalar_lea.vmem [#allocation2], 96
  %450 = vst [vmem:[%s449] sm:$0xff] %v387
  %451 = vst [vmem:[%s449 + $0x8] sm:$0xff] %v407
  %452 = vst [vmem:[%s449 + $0x10] sm:$0xff] %v427
  %453 = vst [vmem:[%s449 + $0x18] sm:$0xff] %v447
  %s454 = scalar_lea.vmem %s0, 32
  %v455 = vld [vmem:[%s454] sm:$0xff]
  %v456 = vld [vmem:[%s1] sm:$0xff]
  %v457 = vld [vmem:[%s1 + $0x8] sm:$0xff]
  %v458 = vld [vmem:[%s1 + $0x10] sm:$0xff]
  %v459 = vld [vmem:[%s1 + $0x18] sm:$0xff]
  %v460 = vld [vmem:[%s1 + $0x20] sm:$0xff]
  %v461 = vld [vmem:[%s1 + $0x28] sm:$0xff]
  %v462 = vld [vmem:[%s1 + $0x30] sm:$0xff]
  %v463 = vld [vmem:[%s1 + $0x38] sm:$0xff]
  %v464 = vld [vmem:[%s3] sm:$0xf]
  %v466 = vperm.slane %v464, 0
  %v467 = vperm.slane %v464, 1
  %v468 = vperm.slane %v464, 2
  %v469 = vperm.slane %v464, 3
  %v475 = vsel %vm42, %v455, 0
  %477 = vmatpush.msra.mxu0 0.0
  %478 = vmatpush.msra.mxu0 0.0
  %479 = vmatpush.msra.mxu0 0.0
  %480 = vmatpush.msra.mxu0 0.0
  %481 = vmatpush.msra.mxu0 0.0
  %482 = vmatpush.msra.mxu0 0.0
  %483 = vmatpush.msra.mxu0 0.0
  %484 = vmatpush.msra.mxu0 0.0
  %485 = vmatpush.msra.mxu0 0.0
  %486 = vmatpush.msra.mxu0 0.0
  %487 = vmatpush.msra.mxu0 0.0
  %488 = vmatpush.msra.mxu0 0.0
  %489 = vmatpush.msra.mxu0 0.0
  %490 = vmatpush.msra.mxu0 0.0
  %491 = vmatpush.msra.mxu0 %v460
  %492 = vmatpush.msra.mxu0 %v456
  %493 = vmatmul.f32.gmra.mxu0 %v475
  %v494 = vpop.f32.mrf.mxu0
  %v495 = vadd.f32 %v466, %v494
  %496 = vdwg.mxu0
  %497 = vmatpush.msra.mxu0 0.0
  %498 = vmatpush.msra.mxu0 0.0
  %499 = vmatpush.msra.mxu0 0.0
  %500 = vmatpush.msra.mxu0 0.0
  %501 = vmatpush.msra.mxu0 0.0
  %502 = vmatpush.msra.mxu0 0.0
  %503 = vmatpush.msra.mxu0 0.0
  %504 = vmatpush.msra.mxu0 0.0
  %505 = vmatpush.msra.mxu0 0.0
  %506 = vmatpush.msra.mxu0 0.0
  %507 = vmatpush.msra.mxu0 0.0
  %508 = vmatpush.msra.mxu0 0.0
  %509 = vmatpush.msra.mxu0 0.0
  %510 = vmatpush.msra.mxu0 0.0
  %511 = vmatpush.msra.mxu0 %v461
  %512 = vmatpush.msra.mxu0 %v457
  %513 = vmatmul.f32.gmra.mxu0 %v475
  %v514 = vpop.f32.mrf.mxu0
  %v515 = vadd.f32 %v467, %v514
  %516 = vdwg.mxu0
  %517 = vmatpush.msra.mxu0 0.0
  %518 = vmatpush.msra.mxu0 0.0
  %519 = vmatpush.msra.mxu0 0.0
  %520 = vmatpush.msra.mxu0 0.0
  %521 = vmatpush.msra.mxu0 0.0
  %522 = vmatpush.msra.mxu0 0.0
  %523 = vmatpush.msra.mxu0 0.0
  %524 = vmatpush.msra.mxu0 0.0
  %525 = vmatpush.msra.mxu0 0.0
  %526 = vmatpush.msra.mxu0 0.0
  %527 = vmatpush.msra.mxu0 0.0
  %528 = vmatpush.msra.mxu0 0.0
  %529 = vmatpush.msra.mxu0 0.0
  %530 = vmatpush.msra.mxu0 0.0
  %531 = vmatpush.msra.mxu0 %v462
  %532 = vmatpush.msra.mxu0 %v458
  %533 = vmatmul.f32.gmra.mxu0 %v475
  %v534 = vpop.f32.mrf.mxu0
  %v535 = vadd.f32 %v468, %v534
  %536 = vdwg.mxu0
  %537 = vmatpush.msra.mxu0 0.0
  %538 = vmatpush.msra.mxu0 0.0
  %539 = vmatpush.msra.mxu0 0.0
  %540 = vmatpush.msra.mxu0 0.0
  %541 = vmatpush.msra.mxu0 0.0
  %542 = vmatpush.msra.mxu0 0.0
  %543 = vmatpush.msra.mxu0 0.0
  %544 = vmatpush.msra.mxu0 0.0
  %545 = vmatpush.msra.mxu0 0.0
  %546 = vmatpush.msra.mxu0 0.0
  %547 = vmatpush.msra.mxu0 0.0
  %548 = vmatpush.msra.mxu0 0.0
  %549 = vmatpush.msra.mxu0 0.0
  %550 = vmatpush.msra.mxu0 0.0
  %551 = vmatpush.msra.mxu0 %v463
  %552 = vmatpush.msra.mxu0 %v459
  %553 = vmatmul.f32.gmra.mxu0 %v475
  %v554 = vpop.f32.mrf.mxu0
  %v555 = vadd.f32 %v469, %v554
  %556 = vdwg.mxu0
  %s557 = scalar_lea.vmem [#allocation2], 128
  %558 = vst [vmem:[%s557] sm:$0xff] %v495
  %559 = vst [vmem:[%s557 + $0x8] sm:$0xff] %v515
  %560 = vst [vmem:[%s557 + $0x10] sm:$0xff] %v535
  %561 = vst [vmem:[%s557 + $0x18] sm:$0xff] %v555
  %s562 = scalar_lea.vmem %s0, 40
  %v563 = vld [vmem:[%s562] sm:$0xff]
  %v564 = vld [vmem:[%s1] sm:$0xff]
  %v565 = vld [vmem:[%s1 + $0x8] sm:$0xff]
  %v566 = vld [vmem:[%s1 + $0x10] sm:$0xff]
  %v567 = vld [vmem:[%s1 + $0x18] sm:$0xff]
  %v568 = vld [vmem:[%s1 + $0x20] sm:$0xff]
  %v569 = vld [vmem:[%s1 + $0x28] sm:$0xff]
  %v570 = vld [vmem:[%s1 + $0x30] sm:$0xff]
  %v571 = vld [vmem:[%s1 + $0x38] sm:$0xff]
  %v572 = vld [vmem:[%s3] sm:$0xf]
  %v574 = vperm.slane %v572, 0
  %v575 = vperm.slane %v572, 1
  %v576 = vperm.slane %v572, 2
  %v577 = vperm.slane %v572, 3
  %v583 = vsel %vm42, %v563, 0
  %585 = vmatpush.msra.mxu0 0.0
  %586 = vmatpush.msra.mxu0 0.0
  %587 = vmatpush.msra.mxu0 0.0
  %588 = vmatpush.msra.mxu0 0.0
  %589 = vmatpush.msra.mxu0 0.0
  %590 = vmatpush.msra.mxu0 0.0
  %591 = vmatpush.msra.mxu0 0.0
  %592 = vmatpush.msra.mxu0 0.0
  %593 = vmatpush.msra.mxu0 0.0
  %594 = vmatpush.msra.mxu0 0.0
  %595 = vmatpush.msra.mxu0 0.0
  %596 = vmatpush.msra.mxu0 0.0
  %597 = vmatpush.msra.mxu0 0.0
  %598 = vmatpush.msra.mxu0 0.0
  %599 = vmatpush.msra.mxu0 %v568
  %600 = vmatpush.msra.mxu0 %v564
  %601 = vmatmul.f32.gmra.mxu0 %v583
  %v602 = vpop.f32.mrf.mxu0
  %v603 = vadd.f32 %v574, %v602
  %604 = vdwg.mxu0
  %605 = vmatpush.msra.mxu0 0.0
  %606 = vmatpush.msra.mxu0 0.0
  %607 = vmatpush.msra.mxu0 0.0
  %608 = vmatpush.msra.mxu0 0.0
  %609 = vmatpush.msra.mxu0 0.0
  %610 = vmatpush.msra.mxu0 0.0
  %611 = vmatpush.msra.mxu0 0.0
  %612 = vmatpush.msra.mxu0 0.0
  %613 = vmatpush.msra.mxu0 0.0
  %614 = vmatpush.msra.mxu0 0.0
  %615 = vmatpush.msra.mxu0 0.0
  %616 = vmatpush.msra.mxu0 0.0
  %617 = vmatpush.msra.mxu0 0.0
  %618 = vmatpush.msra.mxu0 0.0
  %619 = vmatpush.msra.mxu0 %v569
  %620 = vmatpush.msra.mxu0 %v565
  %621 = vmatmul.f32.gmra.mxu0 %v583
  %v622 = vpop.f32.mrf.mxu0
  %v623 = vadd.f32 %v575, %v622
  %624 = vdwg.mxu0
  %625 = vmatpush.msra.mxu0 0.0
  %626 = vmatpush.msra.mxu0 0.0
  %627 = vmatpush.msra.mxu0 0.0
  %628 = vmatpush.msra.mxu0 0.0
  %629 = vmatpush.msra.mxu0 0.0
  %630 = vmatpush.msra.mxu0 0.0
  %631 = vmatpush.msra.mxu0 0.0
  %632 = vmatpush.msra.mxu0 0.0
  %633 = vmatpush.msra.mxu0 0.0
  %634 = vmatpush.msra.mxu0 0.0
  %635 = vmatpush.msra.mxu0 0.0
  %636 = vmatpush.msra.mxu0 0.0
  %637 = vmatpush.msra.mxu0 0.0
  %638 = vmatpush.msra.mxu0 0.0
  %639 = vmatpush.msra.mxu0 %v570
  %640 = vmatpush.msra.mxu0 %v566
  %641 = vmatmul.f32.gmra.mxu0 %v583
  %v642 = vpop.f32.mrf.mxu0
  %v643 = vadd.f32 %v576, %v642
  %644 = vdwg.mxu0
  %645 = vmatpush.msra.mxu0 0.0
  %646 = vmatpush.msra.mxu0 0.0
  %647 = vmatpush.msra.mxu0 0.0
  %648 = vmatpush.msra.mxu0 0.0
  %649 = vmatpush.msra.mxu0 0.0
  %650 = vmatpush.msra.mxu0 0.0
  %651 = vmatpush.msra.mxu0 0.0
  %652 = vmatpush.msra.mxu0 0.0
  %653 = vmatpush.msra.mxu0 0.0
  %654 = vmatpush.msra.mxu0 0.0
  %655 = vmatpush.msra.mxu0 0.0
  %656 = vmatpush.msra.mxu0 0.0
  %657 = vmatpush.msra.mxu0 0.0
  %658 = vmatpush.msra.mxu0 0.0
  %659 = vmatpush.msra.mxu0 %v571
  %660 = vmatpush.msra.mxu0 %v567
  %661 = vmatmul.f32.gmra.mxu0 %v583
  %v662 = vpop.f32.mrf.mxu0
  %v663 = vadd.f32 %v577, %v662
  %664 = vdwg.mxu0
  %s665 = scalar_lea.vmem [#allocation2], 160
  %666 = vst [vmem:[%s665] sm:$0xff] %v603
  %667 = vst [vmem:[%s665 + $0x8] sm:$0xff] %v623
  %668 = vst [vmem:[%s665 + $0x10] sm:$0xff] %v643
  %669 = vst [vmem:[%s665 + $0x18] sm:$0xff] %v663
  %s670 = scalar_lea.vmem %s0, 48
  %v671 = vld [vmem:[%s670] sm:$0xff]
  %v672 = vld [vmem:[%s1] sm:$0xff]
  %v673 = vld [vmem:[%s1 + $0x8] sm:$0xff]
  %v674 = vld [vmem:[%s1 + $0x10] sm:$0xff]
  %v675 = vld [vmem:[%s1 + $0x18] sm:$0xff]
  %v676 = vld [vmem:[%s1 + $0x20] sm:$0xff]
  %v677 = vld [vmem:[%s1 + $0x28] sm:$0xff]
  %v678 = vld [vmem:[%s1 + $0x30] sm:$0xff]
  %v679 = vld [vmem:[%s1 + $0x38] sm:$0xff]
  %v680 = vld [vmem:[%s3] sm:$0xf]
  %v682 = vperm.slane %v680, 0
  %v683 = vperm.slane %v680, 1
  %v684 = vperm.slane %v680, 2
  %v685 = vperm.slane %v680, 3
  %v691 = vsel %vm42, %v671, 0
  %693 = vmatpush.msra.mxu0 0.0
  %694 = vmatpush.msra.mxu0 0.0
  %695 = vmatpush.msra.mxu0 0.0
  %696 = vmatpush.msra.mxu0 0.0
  %697 = vmatpush.msra.mxu0 0.0
  %698 = vmatpush.msra.mxu0 0.0
  %699 = vmatpush.msra.mxu0 0.0
  %700 = vmatpush.msra.mxu0 0.0
  %701 = vmatpush.msra.mxu0 0.0
  %702 = vmatpush.msra.mxu0 0.0
  %703 = vmatpush.msra.mxu0 0.0
  %704 = vmatpush.msra.mxu0 0.0
  %705 = vmatpush.msra.mxu0 0.0
  %706 = vmatpush.msra.mxu0 0.0
  %707 = vmatpush.msra.mxu0 %v676
  %708 = vmatpush.msra.mxu0 %v672
  %709 = vmatmul.f32.gmra.mxu0 %v691
  %v710 = vpop.f32.mrf.mxu0
  %v711 = vadd.f32 %v682, %v710
  %712 = vdwg.mxu0
  %713 = vmatpush.msra.mxu0 0.0
  %714 = vmatpush.msra.mxu0 0.0
  %715 = vmatpush.msra.mxu0 0.0
  %716 = vmatpush.msra.mxu0 0.0
  %717 = vmatpush.msra.mxu0 0.0
  %718 = vmatpush.msra.mxu0 0.0
  %719 = vmatpush.msra.mxu0 0.0
  %720 = vmatpush.msra.mxu0 0.0
  %721 = vmatpush.msra.mxu0 0.0
  %722 = vmatpush.msra.mxu0 0.0
  %723 = vmatpush.msra.mxu0 0.0
  %724 = vmatpush.msra.mxu0 0.0
  %725 = vmatpush.msra.mxu0 0.0
  %726 = vmatpush.msra.mxu0 0.0
  %727 = vmatpush.msra.mxu0 %v677
  %728 = vmatpush.msra.mxu0 %v673
  %729 = vmatmul.f32.gmra.mxu0 %v691
  %v730 = vpop.f32.mrf.mxu0
  %v731 = vadd.f32 %v683, %v730
  %732 = vdwg.mxu0
  %733 = vmatpush.msra.mxu0 0.0
  %734 = vmatpush.msra.mxu0 0.0
  %735 = vmatpush.msra.mxu0 0.0
  %736 = vmatpush.msra.mxu0 0.0
  %737 = vmatpush.msra.mxu0 0.0
  %738 = vmatpush.msra.mxu0 0.0
  %739 = vmatpush.msra.mxu0 0.0
  %740 = vmatpush.msra.mxu0 0.0
  %741 = vmatpush.msra.mxu0 0.0
  %742 = vmatpush.msra.mxu0 0.0
  %743 = vmatpush.msra.mxu0 0.0
  %744 = vmatpush.msra.mxu0 0.0
  %745 = vmatpush.msra.mxu0 0.0
  %746 = vmatpush.msra.mxu0 0.0
  %747 = vmatpush.msra.mxu0 %v678
  %748 = vmatpush.msra.mxu0 %v674
  %749 = vmatmul.f32.gmra.mxu0 %v691
  %v750 = vpop.f32.mrf.mxu0
  %v751 = vadd.f32 %v684, %v750
  %752 = vdwg.mxu0
  %753 = vmatpush.msra.mxu0 0.0
  %754 = vmatpush.msra.mxu0 0.0
  %755 = vmatpush.msra.mxu0 0.0
  %756 = vmatpush.msra.mxu0 0.0
  %757 = vmatpush.msra.mxu0 0.0
  %758 = vmatpush.msra.mxu0 0.0
  %759 = vmatpush.msra.mxu0 0.0
  %760 = vmatpush.msra.mxu0 0.0
  %761 = vmatpush.msra.mxu0 0.0
  %762 = vmatpush.msra.mxu0 0.0
  %763 = vmatpush.msra.mxu0 0.0
  %764 = vmatpush.msra.mxu0 0.0
  %765 = vmatpush.msra.mxu0 0.0
  %766 = vmatpush.msra.mxu0 0.0
  %767 = vmatpush.msra.mxu0 %v679
  %768 = vmatpush.msra.mxu0 %v675
  %769 = vmatmul.f32.gmra.mxu0 %v691
  %v770 = vpop.f32.mrf.mxu0
  %v771 = vadd.f32 %v685, %v770
  %772 = vdwg.mxu0
  %s773 = scalar_lea.vmem [#allocation2], 192
  %774 = vst [vmem:[%s773] sm:$0xff] %v711
  %775 = vst [vmem:[%s773 + $0x8] sm:$0xff] %v731
  %776 = vst [vmem:[%s773 + $0x10] sm:$0xff] %v751
  %777 = vst [vmem:[%s773 + $0x18] sm:$0xff] %v771
  %s778 = scalar_lea.vmem %s0, 56
  %v779 = vld [vmem:[%s778] sm:$0xff]
  %v780 = vld [vmem:[%s1] sm:$0xff]
  %v781 = vld [vmem:[%s1 + $0x8] sm:$0xff]
  %v782 = vld [vmem:[%s1 + $0x10] sm:$0xff]
  %v783 = vld [vmem:[%s1 + $0x18] sm:$0xff]
  %v784 = vld [vmem:[%s1 + $0x20] sm:$0xff]
  %v785 = vld [vmem:[%s1 + $0x28] sm:$0xff]
  %v786 = vld [vmem:[%s1 + $0x30] sm:$0xff]
  %v787 = vld [vmem:[%s1 + $0x38] sm:$0xff]
  %v788 = vld [vmem:[%s3] sm:$0xf]
  %v790 = vperm.slane %v788, 0
  %v791 = vperm.slane %v788, 1
  %v792 = vperm.slane %v788, 2
  %v793 = vperm.slane %v788, 3
  %v799 = vsel %vm42, %v779, 0
  %801 = vmatpush.msra.mxu0 0.0
  %802 = vmatpush.msra.mxu0 0.0
  %803 = vmatpush.msra.mxu0 0.0
  %804 = vmatpush.msra.mxu0 0.0
  %805 = vmatpush.msra.mxu0 0.0
  %806 = vmatpush.msra.mxu0 0.0
  %807 = vmatpush.msra.mxu0 0.0
  %808 = vmatpush.msra.mxu0 0.0
  %809 = vmatpush.msra.mxu0 0.0
  %810 = vmatpush.msra.mxu0 0.0
  %811 = vmatpush.msra.mxu0 0.0
  %812 = vmatpush.msra.mxu0 0.0
  %813 = vmatpush.msra.mxu0 0.0
  %814 = vmatpush.msra.mxu0 0.0
  %815 = vmatpush.msra.mxu0 %v784
  %816 = vmatpush.msra.mxu0 %v780
  %817 = vmatmul.f32.gmra.mxu0 %v799
  %v818 = vpop.f32.mrf.mxu0
  %v819 = vadd.f32 %v790, %v818
  %820 = vdwg.mxu0
  %821 = vmatpush.msra.mxu0 0.0
  %822 = vmatpush.msra.mxu0 0.0
  %823 = vmatpush.msra.mxu0 0.0
  %824 = vmatpush.msra.mxu0 0.0
  %825 = vmatpush.msra.mxu0 0.0
  %826 = vmatpush.msra.mxu0 0.0
  %827 = vmatpush.msra.mxu0 0.0
  %828 = vmatpush.msra.mxu0 0.0
  %829 = vmatpush.msra.mxu0 0.0
  %830 = vmatpush.msra.mxu0 0.0
  %831 = vmatpush.msra.mxu0 0.0
  %832 = vmatpush.msra.mxu0 0.0
  %833 = vmatpush.msra.mxu0 0.0
  %834 = vmatpush.msra.mxu0 0.0
  %835 = vmatpush.msra.mxu0 %v785
  %836 = vmatpush.msra.mxu0 %v781
  %837 = vmatmul.f32.gmra.mxu0 %v799
  %v838 = vpop.f32.mrf.mxu0
  %v839 = vadd.f32 %v791, %v838
  %840 = vdwg.mxu0
  %841 = vmatpush.msra.mxu0 0.0
  %842 = vmatpush.msra.mxu0 0.0
  %843 = vmatpush.msra.mxu0 0.0
  %844 = vmatpush.msra.mxu0 0.0
  %845 = vmatpush.msra.mxu0 0.0
  %846 = vmatpush.msra.mxu0 0.0
  %847 = vmatpush.msra.mxu0 0.0
  %848 = vmatpush.msra.mxu0 0.0
  %849 = vmatpush.msra.mxu0 0.0
  %850 = vmatpush.msra.mxu0 0.0
  %851 = vmatpush.msra.mxu0 0.0
  %852 = vmatpush.msra.mxu0 0.0
  %853 = vmatpush.msra.mxu0 0.0
  %854 = vmatpush.msra.mxu0 0.0
  %855 = vmatpush.msra.mxu0 %v786
  %856 = vmatpush.msra.mxu0 %v782
  %857 = vmatmul.f32.gmra.mxu0 %v799
  %v858 = vpop.f32.mrf.mxu0
  %v859 = vadd.f32 %v792, %v858
  %860 = vdwg.mxu0
  %861 = vmatpush.msra.mxu0 0.0
  %862 = vmatpush.msra.mxu0 0.0
  %863 = vmatpush.msra.mxu0 0.0
  %864 = vmatpush.msra.mxu0 0.0
  %865 = vmatpush.msra.mxu0 0.0
  %866 = vmatpush.msra.mxu0 0.0
  %867 = vmatpush.msra.mxu0 0.0
  %868 = vmatpush.msra.mxu0 0.0
  %869 = vmatpush.msra.mxu0 0.0
  %870 = vmatpush.msra.mxu0 0.0
  %871 = vmatpush.msra.mxu0 0.0
  %872 = vmatpush.msra.mxu0 0.0
  %873 = vmatpush.msra.mxu0 0.0
  %874 = vmatpush.msra.mxu0 0.0
  %875 = vmatpush.msra.mxu0 %v787
  %876 = vmatpush.msra.mxu0 %v783
  %877 = vmatmul.f32.gmra.mxu0 %v799
  %v878 = vpop.f32.mrf.mxu0
  %v879 = vadd.f32 %v793, %v878
  %880 = vdwg.mxu0
  %s881 = scalar_lea.vmem [#allocation2], 224
  %882 = vst [vmem:[%s881] sm:$0xff] %v819
  %883 = vst [vmem:[%s881 + $0x8] sm:$0xff] %v839
  %884 = vst [vmem:[%s881 + $0x10] sm:$0xff] %v859
  %885 = vst [vmem:[%s881 + $0x18] sm:$0xff] %v879
  %v886 = vld [vmem:[#allocation2] sm:$0xff]
  %v887 = vld [vmem:[#allocation2 + $0x8] sm:$0xff]
  %v888 = vld [vmem:[#allocation2 + $0x10] sm:$0xff]
  %v889 = vld [vmem:[#allocation2 + $0x18] sm:$0xff]
  %v890 = vld [vmem:[%s2] sm:$0xff]
  %v891 = vld [vmem:[%s2 + $0x8] sm:$0xff]
  %v892 = vld [vmem:[%s2 + $0x10] sm:$0xff]
  %v893 = vld [vmem:[%s2 + $0x18] sm:$0xff]
  %v894 = vld [vmem:[%s2 + $0x20] sm:$0xff]
  %v895 = vld [vmem:[%s2 + $0x28] sm:$0xff]
  %v896 = vld [vmem:[%s2 + $0x30] sm:$0xff]
  %v897 = vld [vmem:[%s2 + $0x38] sm:$0xff]
  %v898 = vld [vmem:[%s2 + $0x40] sm:$0xff]
  %v899 = vld [vmem:[%s2 + $0x48] sm:$0xff]
  %v900 = vld [vmem:[%s2 + $0x50] sm:$0xff]
  %v901 = vld [vmem:[%s2 + $0x58] sm:$0xff]
  %v902 = vld [vmem:[%s2 + $0x60] sm:$0xff]
  %v903 = vld [vmem:[%s2 + $0x68] sm:$0xff]
  %v904 = vld [vmem:[%s2 + $0x70] sm:$0xff]
  %v905 = vld [vmem:[%s2 + $0x78] sm:$0xff]
  %v906 = vld [vmem:[%s2 + $0x80] sm:$0xff]
  %v907 = vld [vmem:[%s2 + $0x88] sm:$0xff]
  %v908 = vld [vmem:[%s2 + $0x90] sm:$0xff]
  %v909 = vld [vmem:[%s2 + $0x98] sm:$0xff]
  %v910 = vld [vmem:[%s2 + $0xa0] sm:$0xff]
  %v911 = vld [vmem:[%s2 + $0xa8] sm:$0xff]
  %v912 = vld [vmem:[%s2 + $0xb0] sm:$0xff]
  %v913 = vld [vmem:[%s2 + $0xb8] sm:$0xff]
  %v914 = vld [vmem:[%s2 + $0xc0] sm:$0xff]
  %v915 = vld [vmem:[%s2 + $0xc8] sm:$0xff]
  %v916 = vld [vmem:[%s2 + $0xd0] sm:$0xff]
  %v917 = vld [vmem:[%s2 + $0xd8] sm:$0xff]
  %v918 = vld [vmem:[%s2 + $0xe0] sm:$0xff]
  %v919 = vld [vmem:[%s2 + $0xe8] sm:$0xff]
  %v920 = vld [vmem:[%s2 + $0xf0] sm:$0xff]
  %v921 = vld [vmem:[%s2 + $0xf8] sm:$0xff]
  %v922 = vld [vmem:[%s2 + $0x100] sm:$0xff]
  %v923 = vld [vmem:[%s2 + $0x108] sm:$0xff]
  %v924 = vld [vmem:[%s2 + $0x110] sm:$0xff]
  %v925 = vld [vmem:[%s2 + $0x118] sm:$0xff]
  %v926 = vld [vmem:[%s2 + $0x120] sm:$0xff]
  %v927 = vld [vmem:[%s2 + $0x128] sm:$0xff]
  %v928 = vld [vmem:[%s2 + $0x130] sm:$0xff]
  %v929 = vld [vmem:[%s2 + $0x138] sm:$0xff]
  %v930 = vld [vmem:[%s2 + $0x140] sm:$0xff]
  %v931 = vld [vmem:[%s2 + $0x148] sm:$0xff]
  %v932 = vld [vmem:[%s2 + $0x150] sm:$0xff]
  %v933 = vld [vmem:[%s2 + $0x158] sm:$0xff]
  %v934 = vld [vmem:[%s2 + $0x160] sm:$0xff]
  %v935 = vld [vmem:[%s2 + $0x168] sm:$0xff]
  %v936 = vld [vmem:[%s2 + $0x170] sm:$0xff]
  %v937 = vld [vmem:[%s2 + $0x178] sm:$0xff]
  %v938 = vld [vmem:[%s2 + $0x180] sm:$0xff]
  %v939 = vld [vmem:[%s2 + $0x188] sm:$0xff]
  %v940 = vld [vmem:[%s2 + $0x190] sm:$0xff]
  %v941 = vld [vmem:[%s2 + $0x198] sm:$0xff]
  %v942 = vld [vmem:[%s2 + $0x1a0] sm:$0xff]
  %v943 = vld [vmem:[%s2 + $0x1a8] sm:$0xff]
  %v944 = vld [vmem:[%s2 + $0x1b0] sm:$0xff]
  %v945 = vld [vmem:[%s2 + $0x1b8] sm:$0xff]
  %v946 = vld [vmem:[%s2 + $0x1c0] sm:$0xff]
  %v947 = vld [vmem:[%s2 + $0x1c8] sm:$0xff]
  %v948 = vld [vmem:[%s2 + $0x1d0] sm:$0xff]
  %v949 = vld [vmem:[%s2 + $0x1d8] sm:$0xff]
  %v950 = vld [vmem:[%s2 + $0x1e0] sm:$0xff]
  %v951 = vld [vmem:[%s2 + $0x1e8] sm:$0xff]
  %v952 = vld [vmem:[%s2 + $0x1f0] sm:$0xff]
  %v953 = vld [vmem:[%s2 + $0x1f8] sm:$0xff]
  %954 = vmatpush.msra.mxu0 %v950
  %955 = vmatpush.msra.mxu0 %v946
  %956 = vmatpush.msra.mxu0 %v942
  %957 = vmatpush.msra.mxu0 %v938
  %958 = vmatpush.msra.mxu0 %v934
  %959 = vmatpush.msra.mxu0 %v930
  %960 = vmatpush.msra.mxu0 %v926
  %961 = vmatpush.msra.mxu0 %v922
  %962 = vmatpush.msra.mxu0 %v918
  %963 = vmatpush.msra.mxu0 %v914
  %964 = vmatpush.msra.mxu0 %v910
  %965 = vmatpush.msra.mxu0 %v906
  %966 = vmatpush.msra.mxu0 %v902
  %967 = vmatpush.msra.mxu0 %v898
  %968 = vmatpush.msra.mxu0 %v894
  %969 = vmatpush.msra.mxu0 %v890
  %970 = vmatmul.f32.gmra.mxu0 0.0
  %v971 = vpop.f32.mrf.mxu0
  %v972 = vadd.f32 0.0, %v971
  %973 = vdwg.mxu0
  %974 = vmatpush.msra.mxu0 %v951
  %975 = vmatpush.msra.mxu0 %v947
  %976 = vmatpush.msra.mxu0 %v943
  %977 = vmatpush.msra.mxu0 %v939
  %978 = vmatpush.msra.mxu0 %v935
  %979 = vmatpush.msra.mxu0 %v931
  %980 = vmatpush.msra.mxu0 %v927
  %981 = vmatpush.msra.mxu0 %v923
  %982 = vmatpush.msra.mxu0 %v919
  %983 = vmatpush.msra.mxu0 %v915
  %984 = vmatpush.msra.mxu0 %v911
  %985 = vmatpush.msra.mxu0 %v907
  %986 = vmatpush.msra.mxu0 %v903
  %987 = vmatpush.msra.mxu0 %v899
  %988 = vmatpush.msra.mxu0 %v895
  %989 = vmatpush.msra.mxu0 %v891
  %990 = vmatmul.f32.gmra.mxu0 0.0
  %v991 = vpop.f32.mrf.mxu0
  %v992 = vadd.f32 0.0, %v991
  %993 = vdwg.mxu0
  %994 = vmatpush.msra.mxu0 %v952
  %995 = vmatpush.msra.mxu0 %v948
  %996 = vmatpush.msra.mxu0 %v944
  %997 = vmatpush.msra.mxu0 %v940
  %998 = vmatpush.msra.mxu0 %v936
  %999 = vmatpush.msra.mxu0 %v932
  %1000 = vmatpush.msra.mxu0 %v928
  %1001 = vmatpush.msra.mxu0 %v924
  %1002 = vmatpush.msra.mxu0 %v920
  %1003 = vmatpush.msra.mxu0 %v916
  %1004 = vmatpush.msra.mxu0 %v912
  %1005 = vmatpush.msra.mxu0 %v908
  %1006 = vmatpush.msra.mxu0 %v904
  %1007 = vmatpush.msra.mxu0 %v900
  %1008 = vmatpush.msra.mxu0 %v896
  %1009 = vmatpush.msra.mxu0 %v892
  %1010 = vmatmul.f32.gmra.mxu0 0.0
  %v1011 = vpop.f32.mrf.mxu0
  %v1012 = vadd.f32 0.0, %v1011
  %1013 = vdwg.mxu0
  %1014 = vmatpush.msra.mxu0 %v953
  %1015 = vmatpush.msra.mxu0 %v949
  %1016 = vmatpush.msra.mxu0 %v945
  %1017 = vmatpush.msra.mxu0 %v941
  %1018 = vmatpush.msra.mxu0 %v937
  %1019 = vmatpush.msra.mxu0 %v933
  %1020 = vmatpush.msra.mxu0 %v929
  %1021 = vmatpush.msra.mxu0 %v925
  %1022 = vmatpush.msra.mxu0 %v921
  %1023 = vmatpush.msra.mxu0 %v917
  %1024 = vmatpush.msra.mxu0 %v913
  %1025 = vmatpush.msra.mxu0 %v909
  %1026 = vmatpush.msra.mxu0 %v905
  %1027 = vmatpush.msra.mxu0 %v901
  %1028 = vmatpush.msra.mxu0 %v897
  %1029 = vmatpush.msra.mxu0 %v893
  %1030 = vmatmul.f32.gmra.mxu0 0.0
  %v1031 = vpop.f32.mrf.mxu0
  %v1032 = vadd.f32 0.0, %v1031
  %1033 = vdwg.mxu0
  %v1034 = vadd.f32 %v886, %v972
  %v1035 = vadd.f32 %v887, %v992
  %v1036 = vadd.f32 %v888, %v1012
  %v1037 = vadd.f32 %v889, %v1032
  %v1038 = vxor.u32 %v1034, 2147483648
  %v1039 = vmul.f32 %v1038, 1.442695
  %v1040 = vpow.pop %v1039
  %v1041 = vadd.f32 %v1040, 1.0
  %v1042 = vrcp.pop %v1041
  %v1043 = vmul.f32 %v1041, %v1042
  %v1044 = vsub.f32 1.0, %v1043
  %v1045 = vmul.f32 %v1042, %v1044
  %v1046 = vadd.f32 %v1042, %v1045
  %vm1047 = vweird.f32 %v1041
  %vm1048 = vweird.f32 %v1042
  %vm1049 = vmor %vm1047, %vm1048
  %v1050 = vsel %vm1049, %v1042, %v1046
  %v1051 = vand.u32 2147483647, %v1041
  %vm1052 = vcmp.eq.f32.partialorder %v1051, 8.507059e+37
  %v1053 = vand.u32 %v1041, 2147483648
  %v1054 = vor.u32 1.1754944e-38, %v1053
  %v1055 = vsel %vm1052, %v1054, %v1050
  %v1056 = vmul.f32 1.0, %v1055
  %v1057 = vxor.u32 %v1035, 2147483648
  %v1058 = vmul.f32 %v1057, 1.442695
  %v1059 = vpow.pop %v1058
  %v1060 = vadd.f32 %v1059, 1.0
  %v1061 = vrcp.pop %v1060
  %v1062 = vmul.f32 %v1060, %v1061
  %v1063 = vsub.f32 1.0, %v1062
  %v1064 = vmul.f32 %v1061, %v1063
  %v1065 = vadd.f32 %v1061, %v1064
  %vm1066 = vweird.f32 %v1060
  %vm1067 = vweird.f32 %v1061
  %vm1068 = vmor %vm1066, %vm1067
  %v1069 = vsel %vm1068, %v1061, %v1065
  %v1070 = vand.u32 2147483647, %v1060
  %vm1071 = vcmp.eq.f32.partialorder %v1070, 8.507059e+37
  %v1072 = vand.u32 %v1060, 2147483648
  %v1073 = vor.u32 1.1754944e-38, %v1072
  %v1074 = vsel %vm1071, %v1073, %v1069
  %v1075 = vmul.f32 1.0, %v1074
  %v1076 = vtanh.pop %v1036
  %v1077 = vxor.u32 %v1037, 2147483648
  %v1078 = vmul.f32 %v1077, 1.442695
  %v1079 = vpow.pop %v1078
  %v1080 = vadd.f32 %v1079, 1.0
  %v1081 = vrcp.pop %v1080
  %v1082 = vmul.f32 %v1080, %v1081
  %v1083 = vsub.f32 1.0, %v1082
  %v1084 = vmul.f32 %v1081, %v1083
  %v1085 = vadd.f32 %v1081, %v1084
  %vm1086 = vweird.f32 %v1080
  %vm1087 = vweird.f32 %v1081
  %vm1088 = vmor %vm1086, %vm1087
  %v1089 = vsel %vm1088, %v1081, %v1085
  %v1090 = vand.u32 2147483647, %v1080
  %vm1091 = vcmp.eq.f32.partialorder %v1090, 8.507059e+37
  %v1092 = vand.u32 %v1080, 2147483648
  %v1093 = vor.u32 1.1754944e-38, %v1092
  %v1094 = vsel %vm1091, %v1093, %v1089
  %v1095 = vmul.f32 1.0, %v1094
  %v1096 = vmul.f32 %v1075, 0.0
  %v1097 = vmul.f32 %v1056, %v1076
  %v1098 = vadd.f32 %v1096, %v1097
  %v1099 = vtanh.pop %v1098
  %v1100 = vmul.f32 %v1095, %v1099
  %v1101 = vld [vmem:[%s233] sm:$0xff]
  %v1102 = vld [vmem:[%s233 + $0x8] sm:$0xff]
  %v1103 = vld [vmem:[%s233 + $0x10] sm:$0xff]
  %v1104 = vld [vmem:[%s233 + $0x18] sm:$0xff]
  %1105 = vmatpush.msra.mxu0 %v950
  %1106 = vmatpush.msra.mxu0 %v946
  %1107 = vmatpush.msra.mxu0 %v942
  %1108 = vmatpush.msra.mxu0 %v938
  %1109 = vmatpush.msra.mxu0 %v934
  %1110 = vmatpush.msra.mxu0 %v930
  %1111 = vmatpush.msra.mxu0 %v926
  %1112 = vmatpush.msra.mxu0 %v922
  %1113 = vmatpush.msra.mxu0 %v918
  %1114 = vmatpush.msra.mxu0 %v914
  %1115 = vmatpush.msra.mxu0 %v910
  %1116 = vmatpush.msra.mxu0 %v906
  %1117 = vmatpush.msra.mxu0 %v902
  %1118 = vmatpush.msra.mxu0 %v898
  %1119 = vmatpush.msra.mxu0 %v894
  %1120 = vmatpush.msra.mxu0 %v890
  %1121 = vmatmul.f32.gmra.mxu0 %v1100
  %v1122 = vpop.f32.mrf.mxu0
  %v1123 = vadd.f32 0.0, %v1122
  %1124 = vdwg.mxu0
  %1125 = vmatpush.msra.mxu0 %v951
  %1126 = vmatpush.msra.mxu0 %v947
  %1127 = vmatpush.msra.mxu0 %v943
  %1128 = vmatpush.msra.mxu0 %v939
  %1129 = vmatpush.msra.mxu0 %v935
  %1130 = vmatpush.msra.mxu0 %v931
  %1131 = vmatpush.msra.mxu0 %v927
  %1132 = vmatpush.msra.mxu0 %v923
  %1133 = vmatpush.msra.mxu0 %v919
  %1134 = vmatpush.msra.mxu0 %v915
  %1135 = vmatpush.msra.mxu0 %v911
  %1136 = vmatpush.msra.mxu0 %v907
  %1137 = vmatpush.msra.mxu0 %v903
  %1138 = vmatpush.msra.mxu0 %v899
  %1139 = vmatpush.msra.mxu0 %v895
  %1140 = vmatpush.msra.mxu0 %v891
  %1141 = vmatmul.f32.gmra.mxu0 %v1100
  %v1142 = vpop.f32.mrf.mxu0
  %v1143 = vadd.f32 0.0, %v1142
  %1144 = vdwg.mxu0
  %1145 = vmatpush.msra.mxu0 %v952
  %1146 = vmatpush.msra.mxu0 %v948
  %1147 = vmatpush.msra.mxu0 %v944
  %1148 = vmatpush.msra.mxu0 %v940
  %1149 = vmatpush.msra.mxu0 %v936
  %1150 = vmatpush.msra.mxu0 %v932
  %1151 = vmatpush.msra.mxu0 %v928
  %1152 = vmatpush.msra.mxu0 %v924
  %1153 = vmatpush.msra.mxu0 %v920
  %1154 = vmatpush.msra.mxu0 %v916
  %1155 = vmatpush.msra.mxu0 %v912
  %1156 = vmatpush.msra.mxu0 %v908
  %1157 = vmatpush.msra.mxu0 %v904
  %1158 = vmatpush.msra.mxu0 %v900
  %1159 = vmatpush.msra.mxu0 %v896
  %1160 = vmatpush.msra.mxu0 %v892
  %1161 = vmatmul.f32.gmra.mxu0 %v1100
  %v1162 = vpop.f32.mrf.mxu0
  %v1163 = vadd.f32 0.0, %v1162
  %1164 = vdwg.mxu0
  %1165 = vmatpush.msra.mxu0 %v953
  %1166 = vmatpush.msra.mxu0 %v949
  %1167 = vmatpush.msra.mxu0 %v945
  %1168 = vmatpush.msra.mxu0 %v941
  %1169 = vmatpush.msra.mxu0 %v937
  %1170 = vmatpush.msra.mxu0 %v933
  %1171 = vmatpush.msra.mxu0 %v929
  %1172 = vmatpush.msra.mxu0 %v925
  %1173 = vmatpush.msra.mxu0 %v921
  %1174 = vmatpush.msra.mxu0 %v917
  %1175 = vmatpush.msra.mxu0 %v913
  %1176 = vmatpush.msra.mxu0 %v909
  %1177 = vmatpush.msra.mxu0 %v905
  %1178 = vmatpush.msra.mxu0 %v901
  %1179 = vmatpush.msra.mxu0 %v897
  %1180 = vmatpush.msra.mxu0 %v893
  %1181 = vmatmul.f32.gmra.mxu0 %v1100
  %v1182 = vpop.f32.mrf.mxu0
  %v1183 = vadd.f32 0.0, %v1182
  %1184 = vdwg.mxu0
  %v1185 = vadd.f32 %v1101, %v1123
  %v1186 = vadd.f32 %v1102, %v1143
  %v1187 = vadd.f32 %v1103, %v1163
  %v1188 = vadd.f32 %v1104, %v1183
  %v1189 = vxor.u32 %v1185, 2147483648
  %v1190 = vmul.f32 %v1189, 1.442695
  %v1191 = vpow.pop %v1190
  %v1192 = vadd.f32 %v1191, 1.0
  %v1193 = vrcp.pop %v1192
  %v1194 = vmul.f32 %v1192, %v1193
  %v1195 = vsub.f32 1.0, %v1194
  %v1196 = vmul.f32 %v1193, %v1195
  %v1197 = vadd.f32 %v1193, %v1196
  %vm1198 = vweird.f32 %v1192
  %vm1199 = vweird.f32 %v1193
  %vm1200 = vmor %vm1198, %vm1199
  %v1201 = vsel %vm1200, %v1193, %v1197
  %v1202 = vand.u32 2147483647, %v1192
  %vm1203 = vcmp.eq.f32.partialorder %v1202, 8.507059e+37
  %v1204 = vand.u32 %v1192, 2147483648
  %v1205 = vor.u32 1.1754944e-38, %v1204
  %v1206 = vsel %vm1203, %v1205, %v1201
  %v1207 = vmul.f32 1.0, %v1206
  %v1208 = vxor.u32 %v1186, 2147483648
  %v1209 = vmul.f32 %v1208, 1.442695
  %v1210 = vpow.pop %v1209
  %v1211 = vadd.f32 %v1210, 1.0
  %v1212 = vrcp.pop %v1211
  %v1213 = vmul.f32 %v1211, %v1212
  %v1214 = vsub.f32 1.0, %v1213
  %v1215 = vmul.f32 %v1212, %v1214
  %v1216 = vadd.f32 %v1212, %v1215
  %vm1217 = vweird.f32 %v1211
  %vm1218 = vweird.f32 %v1212
  %vm1219 = vmor %vm1217, %vm1218
  %v1220 = vsel %vm1219, %v1212, %v1216
  %v1221 = vand.u32 2147483647, %v1211
  %vm1222 = vcmp.eq.f32.partialorder %v1221, 8.507059e+37
  %v1223 = vand.u32 %v1211, 2147483648
  %v1224 = vor.u32 1.1754944e-38, %v1223
  %v1225 = vsel %vm1222, %v1224, %v1220
  %v1226 = vmul.f32 1.0, %v1225
  %v1227 = vtanh.pop %v1187
  %v1228 = vxor.u32 %v1188, 2147483648
  %v1229 = vmul.f32 %v1228, 1.442695
  %v1230 = vpow.pop %v1229
  %v1231 = vadd.f32 %v1230, 1.0
  %v1232 = vrcp.pop %v1231
  %v1233 = vmul.f32 %v1231, %v1232
  %v1234 = vsub.f32 1.0, %v1233
  %v1235 = vmul.f32 %v1232, %v1234
  %v1236 = vadd.f32 %v1232, %v1235
  %vm1237 = vweird.f32 %v1231
  %vm1238 = vweird.f32 %v1232
  %vm1239 = vmor %vm1237, %vm1238
  %v1240 = vsel %vm1239, %v1232, %v1236
  %v1241 = vand.u32 2147483647, %v1231
  %vm1242 = vcmp.eq.f32.partialorder %v1241, 8.507059e+37
  %v1243 = vand.u32 %v1231, 2147483648
  %v1244 = vor.u32 1.1754944e-38, %v1243
  %v1245 = vsel %vm1242, %v1244, %v1240
  %v1246 = vmul.f32 1.0, %v1245
  %v1247 = vmul.f32 %v1226, %v1098
  %v1248 = vmul.f32 %v1207, %v1227
  %v1249 = vadd.f32 %v1247, %v1248
  %v1250 = vtanh.pop %v1249
  %v1251 = vmul.f32 %v1246, %v1250
  %v1252 = vld [vmem:[%s341] sm:$0xff]
  %v1253 = vld [vmem:[%s341 + $0x8] sm:$0xff]
  %v1254 = vld [vmem:[%s341 + $0x10] sm:$0xff]
  %v1255 = vld [vmem:[%s341 + $0x18] sm:$0xff]
  %1256 = vmatpush.msra.mxu0 %v950
  %1257 = vmatpush.msra.mxu0 %v946
  %1258 = vmatpush.msra.mxu0 %v942
  %1259 = vmatpush.msra.mxu0 %v938
  %1260 = vmatpush.msra.mxu0 %v934
  %1261 = vmatpush.msra.mxu0 %v930
  %1262 = vmatpush.msra.mxu0 %v926
  %1263 = vmatpush.msra.mxu0 %v922
  %1264 = vmatpush.msra.mxu0 %v918
  %1265 = vmatpush.msra.mxu0 %v914
  %1266 = vmatpush.msra.mxu0 %v910
  %1267 = vmatpush.msra.mxu0 %v906
  %1268 = vmatpush.msra.mxu0 %v902
  %1269 = vmatpush.msra.mxu0 %v898
  %1270 = vmatpush.msra.mxu0 %v894
  %1271 = vmatpush.msra.mxu0 %v890
  %1272 = vmatmul.f32.gmra.mxu0 %v1251
  %v1273 = vpop.f32.mrf.mxu0
  %v1274 = vadd.f32 0.0, %v1273
  %1275 = vdwg.mxu0
  %1276 = vmatpush.msra.mxu0 %v951
  %1277 = vmatpush.msra.mxu0 %v947
  %1278 = vmatpush.msra.mxu0 %v943
  %1279 = vmatpush.msra.mxu0 %v939
  %1280 = vmatpush.msra.mxu0 %v935
  %1281 = vmatpush.msra.mxu0 %v931
  %1282 = vmatpush.msra.mxu0 %v927
  %1283 = vmatpush.msra.mxu0 %v923
  %1284 = vmatpush.msra.mxu0 %v919
  %1285 = vmatpush.msra.mxu0 %v915
  %1286 = vmatpush.msra.mxu0 %v911
  %1287 = vmatpush.msra.mxu0 %v907
  %1288 = vmatpush.msra.mxu0 %v903
  %1289 = vmatpush.msra.mxu0 %v899
  %1290 = vmatpush.msra.mxu0 %v895
  %1291 = vmatpush.msra.mxu0 %v891
  %1292 = vmatmul.f32.gmra.mxu0 %v1251
  %v1293 = vpop.f32.mrf.mxu0
  %v1294 = vadd.f32 0.0, %v1293
  %1295 = vdwg.mxu0
  %1296 = vmatpush.msra.mxu0 %v952
  %1297 = vmatpush.msra.mxu0 %v948
  %1298 = vmatpush.msra.mxu0 %v944
  %1299 = vmatpush.msra.mxu0 %v940
  %1300 = vmatpush.msra.mxu0 %v936
  %1301 = vmatpush.msra.mxu0 %v932
  %1302 = vmatpush.msra.mxu0 %v928
  %1303 = vmatpush.msra.mxu0 %v924
  %1304 = vmatpush.msra.mxu0 %v920
  %1305 = vmatpush.msra.mxu0 %v916
  %1306 = vmatpush.msra.mxu0 %v912
  %1307 = vmatpush.msra.mxu0 %v908
  %1308 = vmatpush.msra.mxu0 %v904
  %1309 = vmatpush.msra.mxu0 %v900
  %1310 = vmatpush.msra.mxu0 %v896
  %1311 = vmatpush.msra.mxu0 %v892
  %1312 = vmatmul.f32.gmra.mxu0 %v1251
  %v1313 = vpop.f32.mrf.mxu0
  %v1314 = vadd.f32 0.0, %v1313
  %1315 = vdwg.mxu0
  %1316 = vmatpush.msra.mxu0 %v953
  %1317 = vmatpush.msra.mxu0 %v949
  %1318 = vmatpush.msra.mxu0 %v945
  %1319 = vmatpush.msra.mxu0 %v941
  %1320 = vmatpush.msra.mxu0 %v937
  %1321 = vmatpush.msra.mxu0 %v933
  %1322 = vmatpush.msra.mxu0 %v929
  %1323 = vmatpush.msra.mxu0 %v925
  %1324 = vmatpush.msra.mxu0 %v921
  %1325 = vmatpush.msra.mxu0 %v917
  %1326 = vmatpush.msra.mxu0 %v913
  %1327 = vmatpush.msra.mxu0 %v909
  %1328 = vmatpush.msra.mxu0 %v905
  %1329 = vmatpush.msra.mxu0 %v901
  %1330 = vmatpush.msra.mxu0 %v897
  %1331 = vmatpush.msra.mxu0 %v893
  %1332 = vmatmul.f32.gmra.mxu0 %v1251
  %v1333 = vpop.f32.mrf.mxu0
  %v1334 = vadd.f32 0.0, %v1333
  %1335 = vdwg.mxu0
  %v1336 = vadd.f32 %v1252, %v1274
  %v1337 = vadd.f32 %v1253, %v1294
  %v1338 = vadd.f32 %v1254, %v1314
  %v1339 = vadd.f32 %v1255, %v1334
  %v1340 = vxor.u32 %v1336, 2147483648
  %v1341 = vmul.f32 %v1340, 1.442695
  %v1342 = vpow.pop %v1341
  %v1343 = vadd.f32 %v1342, 1.0
  %v1344 = vrcp.pop %v1343
  %v1345 = vmul.f32 %v1343, %v1344
  %v1346 = vsub.f32 1.0, %v1345
  %v1347 = vmul.f32 %v1344, %v1346
  %v1348 = vadd.f32 %v1344, %v1347
  %vm1349 = vweird.f32 %v1343
  %vm1350 = vweird.f32 %v1344
  %vm1351 = vmor %vm1349, %vm1350
  %v1352 = vsel %vm1351, %v1344, %v1348
  %v1353 = vand.u32 2147483647, %v1343
  %vm1354 = vcmp.eq.f32.partialorder %v1353, 8.507059e+37
  %v1355 = vand.u32 %v1343, 2147483648
  %v1356 = vor.u32 1.1754944e-38, %v1355
  %v1357 = vsel %vm1354, %v1356, %v1352
  %v1358 = vmul.f32 1.0, %v1357
  %v1359 = vxor.u32 %v1337, 2147483648
  %v1360 = vmul.f32 %v1359, 1.442695
  %v1361 = vpow.pop %v1360
  %v1362 = vadd.f32 %v1361, 1.0
  %v1363 = vrcp.pop %v1362
  %v1364 = vmul.f32 %v1362, %v1363
  %v1365 = vsub.f32 1.0, %v1364
  %v1366 = vmul.f32 %v1363, %v1365
  %v1367 = vadd.f32 %v1363, %v1366
  %vm1368 = vweird.f32 %v1362
  %vm1369 = vweird.f32 %v1363
  %vm1370 = vmor %vm1368, %vm1369
  %v1371 = vsel %vm1370, %v1363, %v1367
  %v1372 = vand.u32 2147483647, %v1362
  %vm1373 = vcmp.eq.f32.partialorder %v1372, 8.507059e+37
  %v1374 = vand.u32 %v1362, 2147483648
  %v1375 = vor.u32 1.1754944e-38, %v1374
  %v1376 = vsel %vm1373, %v1375, %v1371
  %v1377 = vmul.f32 1.0, %v1376
  %v1378 = vtanh.pop %v1338
  %v1379 = vxor.u32 %v1339, 2147483648
  %v1380 = vmul.f32 %v1379, 1.442695
  %v1381 = vpow.pop %v1380
  %v1382 = vadd.f32 %v1381, 1.0
  %v1383 = vrcp.pop %v1382
  %v1384 = vmul.f32 %v1382, %v1383
  %v1385 = vsub.f32 1.0, %v1384
  %v1386 = vmul.f32 %v1383, %v1385
  %v1387 = vadd.f32 %v1383, %v1386
  %vm1388 = vweird.f32 %v1382
  %vm1389 = vweird.f32 %v1383
  %vm1390 = vmor %vm1388, %vm1389
  %v1391 = vsel %vm1390, %v1383, %v1387
  %v1392 = vand.u32 2147483647, %v1382
  %vm1393 = vcmp.eq.f32.partialorder %v1392, 8.507059e+37
  %v1394 = vand.u32 %v1382, 2147483648
  %v1395 = vor.u32 1.1754944e-38, %v1394
  %v1396 = vsel %vm1393, %v1395, %v1391
  %v1397 = vmul.f32 1.0, %v1396
  %v1398 = vmul.f32 %v1377, %v1249
  %v1399 = vmul.f32 %v1358, %v1378
  %v1400 = vadd.f32 %v1398, %v1399
  %v1401 = vtanh.pop %v1400
  %v1402 = vmul.f32 %v1397, %v1401
  %v1403 = vld [vmem:[%s449] sm:$0xff]
  %v1404 = vld [vmem:[%s449 + $0x8] sm:$0xff]
  %v1405 = vld [vmem:[%s449 + $0x10] sm:$0xff]
  %v1406 = vld [vmem:[%s449 + $0x18] sm:$0xff]
  %1407 = vmatpush.msra.mxu0 %v950
  %1408 = vmatpush.msra.mxu0 %v946
  %1409 = vmatpush.msra.mxu0 %v942
  %1410 = vmatpush.msra.mxu0 %v938
  %1411 = vmatpush.msra.mxu0 %v934
  %1412 = vmatpush.msra.mxu0 %v930
  %1413 = vmatpush.msra.mxu0 %v926
  %1414 = vmatpush.msra.mxu0 %v922
  %1415 = vmatpush.msra.mxu0 %v918
  %1416 = vmatpush.msra.mxu0 %v914
  %1417 = vmatpush.msra.mxu0 %v910
  %1418 = vmatpush.msra.mxu0 %v906
  %1419 = vmatpush.msra.mxu0 %v902
  %1420 = vmatpush.msra.mxu0 %v898
  %1421 = vmatpush.msra.mxu0 %v894
  %1422 = vmatpush.msra.mxu0 %v890
  %1423 = vmatmul.f32.gmra.mxu0 %v1402
  %v1424 = vpop.f32.mrf.mxu0
  %v1425 = vadd.f32 0.0, %v1424
  %1426 = vdwg.mxu0
  %1427 = vmatpush.msra.mxu0 %v951
  %1428 = vmatpush.msra.mxu0 %v947
  %1429 = vmatpush.msra.mxu0 %v943
  %1430 = vmatpush.msra.mxu0 %v939
  %1431 = vmatpush.msra.mxu0 %v935
  %1432 = vmatpush.msra.mxu0 %v931
  %1433 = vmatpush.msra.mxu0 %v927
  %1434 = vmatpush.msra.mxu0 %v923
  %1435 = vmatpush.msra.mxu0 %v919
  %1436 = vmatpush.msra.mxu0 %v915
  %1437 = vmatpush.msra.mxu0 %v911
  %1438 = vmatpush.msra.mxu0 %v907
  %1439 = vmatpush.msra.mxu0 %v903
  %1440 = vmatpush.msra.mxu0 %v899
  %1441 = vmatpush.msra.mxu0 %v895
  %1442 = vmatpush.msra.mxu0 %v891
  %1443 = vmatmul.f32.gmra.mxu0 %v1402
  %v1444 = vpop.f32.mrf.mxu0
  %v1445 = vadd.f32 0.0, %v1444
  %1446 = vdwg.mxu0
  %1447 = vmatpush.msra.mxu0 %v952
  %1448 = vmatpush.msra.mxu0 %v948
  %1449 = vmatpush.msra.mxu0 %v944
  %1450 = vmatpush.msra.mxu0 %v940
  %1451 = vmatpush.msra.mxu0 %v936
  %1452 = vmatpush.msra.mxu0 %v932
  %1453 = vmatpush.msra.mxu0 %v928
  %1454 = vmatpush.msra.mxu0 %v924
  %1455 = vmatpush.msra.mxu0 %v920
  %1456 = vmatpush.msra.mxu0 %v916
  %1457 = vmatpush.msra.mxu0 %v912
  %1458 = vmatpush.msra.mxu0 %v908
  %1459 = vmatpush.msra.mxu0 %v904
  %1460 = vmatpush.msra.mxu0 %v900
  %1461 = vmatpush.msra.mxu0 %v896
  %1462 = vmatpush.msra.mxu0 %v892
  %1463 = vmatmul.f32.gmra.mxu0 %v1402
  %v1464 = vpop.f32.mrf.mxu0
  %v1465 = vadd.f32 0.0, %v1464
  %1466 = vdwg.mxu0
  %1467 = vmatpush.msra.mxu0 %v953
  %1468 = vmatpush.msra.mxu0 %v949
  %1469 = vmatpush.msra.mxu0 %v945
  %1470 = vmatpush.msra.mxu0 %v941
  %1471 = vmatpush.msra.mxu0 %v937
  %1472 = vmatpush.msra.mxu0 %v933
  %1473 = vmatpush.msra.mxu0 %v929
  %1474 = vmatpush.msra.mxu0 %v925
  %1475 = vmatpush.msra.mxu0 %v921
  %1476 = vmatpush.msra.mxu0 %v917
  %1477 = vmatpush.msra.mxu0 %v913
  %1478 = vmatpush.msra.mxu0 %v909
  %1479 = vmatpush.msra.mxu0 %v905
  %1480 = vmatpush.msra.mxu0 %v901
  %1481 = vmatpush.msra.mxu0 %v897
  %1482 = vmatpush.msra.mxu0 %v893
  %1483 = vmatmul.f32.gmra.mxu0 %v1402
  %v1484 = vpop.f32.mrf.mxu0
  %v1485 = vadd.f32 0.0, %v1484
  %1486 = vdwg.mxu0
  %v1487 = vadd.f32 %v1403, %v1425
  %v1488 = vadd.f32 %v1404, %v1445
  %v1489 = vadd.f32 %v1405, %v1465
  %v1490 = vadd.f32 %v1406, %v1485
  %v1491 = vxor.u32 %v1487, 2147483648
  %v1492 = vmul.f32 %v1491, 1.442695
  %v1493 = vpow.pop %v1492
  %v1494 = vadd.f32 %v1493, 1.0
  %v1495 = vrcp.pop %v1494
  %v1496 = vmul.f32 %v1494, %v1495
  %v1497 = vsub.f32 1.0, %v1496
  %v1498 = vmul.f32 %v1495, %v1497
  %v1499 = vadd.f32 %v1495, %v1498
  %vm1500 = vweird.f32 %v1494
  %vm1501 = vweird.f32 %v1495
  %vm1502 = vmor %vm1500, %vm1501
  %v1503 = vsel %vm1502, %v1495, %v1499
  %v1504 = vand.u32 2147483647, %v1494
  %vm1505 = vcmp.eq.f32.partialorder %v1504, 8.507059e+37
  %v1506 = vand.u32 %v1494, 2147483648
  %v1507 = vor.u32 1.1754944e-38, %v1506
  %v1508 = vsel %vm1505, %v1507, %v1503
  %v1509 = vmul.f32 1.0, %v1508
  %v1510 = vxor.u32 %v1488, 2147483648
  %v1511 = vmul.f32 %v1510, 1.442695
  %v1512 = vpow.pop %v1511
  %v1513 = vadd.f32 %v1512, 1.0
  %v1514 = vrcp.pop %v1513
  %v1515 = vmul.f32 %v1513, %v1514
  %v1516 = vsub.f32 1.0, %v1515
  %v1517 = vmul.f32 %v1514, %v1516
  %v1518 = vadd.f32 %v1514, %v1517
  %vm1519 = vweird.f32 %v1513
  %vm1520 = vweird.f32 %v1514
  %vm1521 = vmor %vm1519, %vm1520
  %v1522 = vsel %vm1521, %v1514, %v1518
  %v1523 = vand.u32 2147483647, %v1513
  %vm1524 = vcmp.eq.f32.partialorder %v1523, 8.507059e+37
  %v1525 = vand.u32 %v1513, 2147483648
  %v1526 = vor.u32 1.1754944e-38, %v1525
  %v1527 = vsel %vm1524, %v1526, %v1522
  %v1528 = vmul.f32 1.0, %v1527
  %v1529 = vtanh.pop %v1489
  %v1530 = vxor.u32 %v1490, 2147483648
  %v1531 = vmul.f32 %v1530, 1.442695
  %v1532 = vpow.pop %v1531
  %v1533 = vadd.f32 %v1532, 1.0
  %v1534 = vrcp.pop %v1533
  %v1535 = vmul.f32 %v1533, %v1534
  %v1536 = vsub.f32 1.0, %v1535
  %v1537 = vmul.f32 %v1534, %v1536
  %v1538 = vadd.f32 %v1534, %v1537
  %vm1539 = vweird.f32 %v1533
  %vm1540 = vweird.f32 %v1534
  %vm1541 = vmor %vm1539, %vm1540
  %v1542 = vsel %vm1541, %v1534, %v1538
  %v1543 = vand.u32 2147483647, %v1533
  %vm1544 = vcmp.eq.f32.partialorder %v1543, 8.507059e+37
  %v1545 = vand.u32 %v1533, 2147483648
  %v1546 = vor.u32 1.1754944e-38, %v1545
  %v1547 = vsel %vm1544, %v1546, %v1542
  %v1548 = vmul.f32 1.0, %v1547
  %v1549 = vmul.f32 %v1528, %v1400
  %v1550 = vmul.f32 %v1509, %v1529
  %v1551 = vadd.f32 %v1549, %v1550
  %v1552 = vtanh.pop %v1551
  %v1553 = vmul.f32 %v1548, %v1552
  %v1554 = vld [vmem:[%s557] sm:$0xff]
  %v1555 = vld [vmem:[%s557 + $0x8] sm:$0xff]
  %v1556 = vld [vmem:[%s557 + $0x10] sm:$0xff]
  %v1557 = vld [vmem:[%s557 + $0x18] sm:$0xff]
  %1558 = vmatpush.msra.mxu0 %v950
  %1559 = vmatpush.msra.mxu0 %v946
  %1560 = vmatpush.msra.mxu0 %v942
  %1561 = vmatpush.msra.mxu0 %v938
  %1562 = vmatpush.msra.mxu0 %v934
  %1563 = vmatpush.msra.mxu0 %v930
  %1564 = vmatpush.msra.mxu0 %v926
  %1565 = vmatpush.msra.mxu0 %v922
  %1566 = vmatpush.msra.mxu0 %v918
  %1567 = vmatpush.msra.mxu0 %v914
  %1568 = vmatpush.msra.mxu0 %v910
  %1569 = vmatpush.msra.mxu0 %v906
  %1570 = vmatpush.msra.mxu0 %v902
  %1571 = vmatpush.msra.mxu0 %v898
  %1572 = vmatpush.msra.mxu0 %v894
  %1573 = vmatpush.msra.mxu0 %v890
  %1574 = vmatmul.f32.gmra.mxu0 %v1553
  %v1575 = vpop.f32.mrf.mxu0
  %v1576 = vadd.f32 0.0, %v1575
  %1577 = vdwg.mxu0
  %1578 = vmatpush.msra.mxu0 %v951
  %1579 = vmatpush.msra.mxu0 %v947
  %1580 = vmatpush.msra.mxu0 %v943
  %1581 = vmatpush.msra.mxu0 %v939
  %1582 = vmatpush.msra.mxu0 %v935
  %1583 = vmatpush.msra.mxu0 %v931
  %1584 = vmatpush.msra.mxu0 %v927
  %1585 = vmatpush.msra.mxu0 %v923
  %1586 = vmatpush.msra.mxu0 %v919
  %1587 = vmatpush.msra.mxu0 %v915
  %1588 = vmatpush.msra.mxu0 %v911
  %1589 = vmatpush.msra.mxu0 %v907
  %1590 = vmatpush.msra.mxu0 %v903
  %1591 = vmatpush.msra.mxu0 %v899
  %1592 = vmatpush.msra.mxu0 %v895
  %1593 = vmatpush.msra.mxu0 %v891
  %1594 = vmatmul.f32.gmra.mxu0 %v1553
  %v1595 = vpop.f32.mrf.mxu0
  %v1596 = vadd.f32 0.0, %v1595
  %1597 = vdwg.mxu0
  %1598 = vmatpush.msra.mxu0 %v952
  %1599 = vmatpush.msra.mxu0 %v948
  %1600 = vmatpush.msra.mxu0 %v944
  %1601 = vmatpush.msra.mxu0 %v940
  %1602 = vmatpush.msra.mxu0 %v936
  %1603 = vmatpush.msra.mxu0 %v932
  %1604 = vmatpush.msra.mxu0 %v928
  %1605 = vmatpush.msra.mxu0 %v924
  %1606 = vmatpush.msra.mxu0 %v920
  %1607 = vmatpush.msra.mxu0 %v916
  %1608 = vmatpush.msra.mxu0 %v912
  %1609 = vmatpush.msra.mxu0 %v908
  %1610 = vmatpush.msra.mxu0 %v904
  %1611 = vmatpush.msra.mxu0 %v900
  %1612 = vmatpush.msra.mxu0 %v896
  %1613 = vmatpush.msra.mxu0 %v892
  %1614 = vmatmul.f32.gmra.mxu0 %v1553
  %v1615 = vpop.f32.mrf.mxu0
  %v1616 = vadd.f32 0.0, %v1615
  %1617 = vdwg.mxu0
  %1618 = vmatpush.msra.mxu0 %v953
  %1619 = vmatpush.msra.mxu0 %v949
  %1620 = vmatpush.msra.mxu0 %v945
  %1621 = vmatpush.msra.mxu0 %v941
  %1622 = vmatpush.msra.mxu0 %v937
  %1623 = vmatpush.msra.mxu0 %v933
  %1624 = vmatpush.msra.mxu0 %v929
  %1625 = vmatpush.msra.mxu0 %v925
  %1626 = vmatpush.msra.mxu0 %v921
  %1627 = vmatpush.msra.mxu0 %v917
  %1628 = vmatpush.msra.mxu0 %v913
  %1629 = vmatpush.msra.mxu0 %v909
  %1630 = vmatpush.msra.mxu0 %v905
  %1631 = vmatpush.msra.mxu0 %v901
  %1632 = vmatpush.msra.mxu0 %v897
  %1633 = vmatpush.msra.mxu0 %v893
  %1634 = vmatmul.f32.gmra.mxu0 %v1553
  %v1635 = vpop.f32.mrf.mxu0
  %v1636 = vadd.f32 0.0, %v1635
  %1637 = vdwg.mxu0
  %v1638 = vadd.f32 %v1554, %v1576
  %v1639 = vadd.f32 %v1555, %v1596
  %v1640 = vadd.f32 %v1556, %v1616
  %v1641 = vadd.f32 %v1557, %v1636
  %v1642 = vxor.u32 %v1638, 2147483648
  %v1643 = vmul.f32 %v1642, 1.442695
  %v1644 = vpow.pop %v1643
  %v1645 = vadd.f32 %v1644, 1.0
  %v1646 = vrcp.pop %v1645
  %v1647 = vmul.f32 %v1645, %v1646
  %v1648 = vsub.f32 1.0, %v1647
  %v1649 = vmul.f32 %v1646, %v1648
  %v1650 = vadd.f32 %v1646, %v1649
  %vm1651 = vweird.f32 %v1645
  %vm1652 = vweird.f32 %v1646
  %vm1653 = vmor %vm1651, %vm1652
  %v1654 = vsel %vm1653, %v1646, %v1650
  %v1655 = vand.u32 2147483647, %v1645
  %vm1656 = vcmp.eq.f32.partialorder %v1655, 8.507059e+37
  %v1657 = vand.u32 %v1645, 2147483648
  %v1658 = vor.u32 1.1754944e-38, %v1657
  %v1659 = vsel %vm1656, %v1658, %v1654
  %v1660 = vmul.f32 1.0, %v1659
  %v1661 = vxor.u32 %v1639, 2147483648
  %v1662 = vmul.f32 %v1661, 1.442695
  %v1663 = vpow.pop %v1662
  %v1664 = vadd.f32 %v1663, 1.0
  %v1665 = vrcp.pop %v1664
  %v1666 = vmul.f32 %v1664, %v1665
  %v1667 = vsub.f32 1.0, %v1666
  %v1668 = vmul.f32 %v1665, %v1667
  %v1669 = vadd.f32 %v1665, %v1668
  %vm1670 = vweird.f32 %v1664
  %vm1671 = vweird.f32 %v1665
  %vm1672 = vmor %vm1670, %vm1671
  %v1673 = vsel %vm1672, %v1665, %v1669
  %v1674 = vand.u32 2147483647, %v1664
  %vm1675 = vcmp.eq.f32.partialorder %v1674, 8.507059e+37
  %v1676 = vand.u32 %v1664, 2147483648
  %v1677 = vor.u32 1.1754944e-38, %v1676
  %v1678 = vsel %vm1675, %v1677, %v1673
  %v1679 = vmul.f32 1.0, %v1678
  %v1680 = vtanh.pop %v1640
  %v1681 = vxor.u32 %v1641, 2147483648
  %v1682 = vmul.f32 %v1681, 1.442695
  %v1683 = vpow.pop %v1682
  %v1684 = vadd.f32 %v1683, 1.0
  %v1685 = vrcp.pop %v1684
  %v1686 = vmul.f32 %v1684, %v1685
  %v1687 = vsub.f32 1.0, %v1686
  %v1688 = vmul.f32 %v1685, %v1687
  %v1689 = vadd.f32 %v1685, %v1688
  %vm1690 = vweird.f32 %v1684
  %vm1691 = vweird.f32 %v1685
  %vm1692 = vmor %vm1690, %vm1691
  %v1693 = vsel %vm1692, %v1685, %v1689
  %v1694 = vand.u32 2147483647, %v1684
  %vm1695 = vcmp.eq.f32.partialorder %v1694, 8.507059e+37
  %v1696 = vand.u32 %v1684, 2147483648
  %v1697 = vor.u32 1.1754944e-38, %v1696
  %v1698 = vsel %vm1695, %v1697, %v1693
  %v1699 = vmul.f32 1.0, %v1698
  %v1700 = vmul.f32 %v1679, %v1551
  %v1701 = vmul.f32 %v1660, %v1680
  %v1702 = vadd.f32 %v1700, %v1701
  %v1703 = vtanh.pop %v1702
  %v1704 = vmul.f32 %v1699, %v1703
  %v1705 = vld [vmem:[%s665] sm:$0xff]
  %v1706 = vld [vmem:[%s665 + $0x8] sm:$0xff]
  %v1707 = vld [vmem:[%s665 + $0x10] sm:$0xff]
  %v1708 = vld [vmem:[%s665 + $0x18] sm:$0xff]
  %1709 = vmatpush.msra.mxu0 %v950
  %1710 = vmatpush.msra.mxu0 %v946
  %1711 = vmatpush.msra.mxu0 %v942
  %1712 = vmatpush.msra.mxu0 %v938
  %1713 = vmatpush.msra.mxu0 %v934
  %1714 = vmatpush.msra.mxu0 %v930
  %1715 = vmatpush.msra.mxu0 %v926
  %1716 = vmatpush.msra.mxu0 %v922
  %1717 = vmatpush.msra.mxu0 %v918
  %1718 = vmatpush.msra.mxu0 %v914
  %1719 = vmatpush.msra.mxu0 %v910
  %1720 = vmatpush.msra.mxu0 %v906
  %1721 = vmatpush.msra.mxu0 %v902
  %1722 = vmatpush.msra.mxu0 %v898
  %1723 = vmatpush.msra.mxu0 %v894
  %1724 = vmatpush.msra.mxu0 %v890
  %1725 = vmatmul.f32.gmra.mxu0 %v1704
  %v1726 = vpop.f32.mrf.mxu0
  %v1727 = vadd.f32 0.0, %v1726
  %1728 = vdwg.mxu0
  %1729 = vmatpush.msra.mxu0 %v951
  %1730 = vmatpush.msra.mxu0 %v947
  %1731 = vmatpush.msra.mxu0 %v943
  %1732 = vmatpush.msra.mxu0 %v939
  %1733 = vmatpush.msra.mxu0 %v935
  %1734 = vmatpush.msra.mxu0 %v931
  %1735 = vmatpush.msra.mxu0 %v927
  %1736 = vmatpush.msra.mxu0 %v923
  %1737 = vmatpush.msra.mxu0 %v919
  %1738 = vmatpush.msra.mxu0 %v915
  %1739 = vmatpush.msra.mxu0 %v911
  %1740 = vmatpush.msra.mxu0 %v907
  %1741 = vmatpush.msra.mxu0 %v903
  %1742 = vmatpush.msra.mxu0 %v899
  %1743 = vmatpush.msra.mxu0 %v895
  %1744 = vmatpush.msra.mxu0 %v891
  %1745 = vmatmul.f32.gmra.mxu0 %v1704
  %v1746 = vpop.f32.mrf.mxu0
  %v1747 = vadd.f32 0.0, %v1746
  %1748 = vdwg.mxu0
  %1749 = vmatpush.msra.mxu0 %v952
  %1750 = vmatpush.msra.mxu0 %v948
  %1751 = vmatpush.msra.mxu0 %v944
  %1752 = vmatpush.msra.mxu0 %v940
  %1753 = vmatpush.msra.mxu0 %v936
  %1754 = vmatpush.msra.mxu0 %v932
  %1755 = vmatpush.msra.mxu0 %v928
  %1756 = vmatpush.msra.mxu0 %v924
  %1757 = vmatpush.msra.mxu0 %v920
  %1758 = vmatpush.msra.mxu0 %v916
  %1759 = vmatpush.msra.mxu0 %v912
  %1760 = vmatpush.msra.mxu0 %v908
  %1761 = vmatpush.msra.mxu0 %v904
  %1762 = vmatpush.msra.mxu0 %v900
  %1763 = vmatpush.msra.mxu0 %v896
  %1764 = vmatpush.msra.mxu0 %v892
  %1765 = vmatmul.f32.gmra.mxu0 %v1704
  %v1766 = vpop.f32.mrf.mxu0
  %v1767 = vadd.f32 0.0, %v1766
  %1768 = vdwg.mxu0
  %1769 = vmatpush.msra.mxu0 %v953
  %1770 = vmatpush.msra.mxu0 %v949
  %1771 = vmatpush.msra.mxu0 %v945
  %1772 = vmatpush.msra.mxu0 %v941
  %1773 = vmatpush.msra.mxu0 %v937
  %1774 = vmatpush.msra.mxu0 %v933
  %1775 = vmatpush.msra.mxu0 %v929
  %1776 = vmatpush.msra.mxu0 %v925
  %1777 = vmatpush.msra.mxu0 %v921
  %1778 = vmatpush.msra.mxu0 %v917
  %1779 = vmatpush.msra.mxu0 %v913
  %1780 = vmatpush.msra.mxu0 %v909
  %1781 = vmatpush.msra.mxu0 %v905
  %1782 = vmatpush.msra.mxu0 %v901
  %1783 = vmatpush.msra.mxu0 %v897
  %1784 = vmatpush.msra.mxu0 %v893
  %1785 = vmatmul.f32.gmra.mxu0 %v1704
  %v1786 = vpop.f32.mrf.mxu0
  %v1787 = vadd.f32 0.0, %v1786
  %1788 = vdwg.mxu0
  %v1789 = vadd.f32 %v1705, %v1727
  %v1790 = vadd.f32 %v1706, %v1747
  %v1791 = vadd.f32 %v1707, %v1767
  %v1792 = vadd.f32 %v1708, %v1787
  %v1793 = vxor.u32 %v1789, 2147483648
  %v1794 = vmul.f32 %v1793, 1.442695
  %v1795 = vpow.pop %v1794
  %v1796 = vadd.f32 %v1795, 1.0
  %v1797 = vrcp.pop %v1796
  %v1798 = vmul.f32 %v1796, %v1797
  %v1799 = vsub.f32 1.0, %v1798
  %v1800 = vmul.f32 %v1797, %v1799
  %v1801 = vadd.f32 %v1797, %v1800
  %vm1802 = vweird.f32 %v1796
  %vm1803 = vweird.f32 %v1797
  %vm1804 = vmor %vm1802, %vm1803
  %v1805 = vsel %vm1804, %v1797, %v1801
  %v1806 = vand.u32 2147483647, %v1796
  %vm1807 = vcmp.eq.f32.partialorder %v1806, 8.507059e+37
  %v1808 = vand.u32 %v1796, 2147483648
  %v1809 = vor.u32 1.1754944e-38, %v1808
  %v1810 = vsel %vm1807, %v1809, %v1805
  %v1811 = vmul.f32 1.0, %v1810
  %v1812 = vxor.u32 %v1790, 2147483648
  %v1813 = vmul.f32 %v1812, 1.442695
  %v1814 = vpow.pop %v1813
  %v1815 = vadd.f32 %v1814, 1.0
  %v1816 = vrcp.pop %v1815
  %v1817 = vmul.f32 %v1815, %v1816
  %v1818 = vsub.f32 1.0, %v1817
  %v1819 = vmul.f32 %v1816, %v1818
  %v1820 = vadd.f32 %v1816, %v1819
  %vm1821 = vweird.f32 %v1815
  %vm1822 = vweird.f32 %v1816
  %vm1823 = vmor %vm1821, %vm1822
  %v1824 = vsel %vm1823, %v1816, %v1820
  %v1825 = vand.u32 2147483647, %v1815
  %vm1826 = vcmp.eq.f32.partialorder %v1825, 8.507059e+37
  %v1827 = vand.u32 %v1815, 2147483648
  %v1828 = vor.u32 1.1754944e-38, %v1827
  %v1829 = vsel %vm1826, %v1828, %v1824
  %v1830 = vmul.f32 1.0, %v1829
  %v1831 = vtanh.pop %v1791
  %v1832 = vxor.u32 %v1792, 2147483648
  %v1833 = vmul.f32 %v1832, 1.442695
  %v1834 = vpow.pop %v1833
  %v1835 = vadd.f32 %v1834, 1.0
  %v1836 = vrcp.pop %v1835
  %v1837 = vmul.f32 %v1835, %v1836
  %v1838 = vsub.f32 1.0, %v1837
  %v1839 = vmul.f32 %v1836, %v1838
  %v1840 = vadd.f32 %v1836, %v1839
  %vm1841 = vweird.f32 %v1835
  %vm1842 = vweird.f32 %v1836
  %vm1843 = vmor %vm1841, %vm1842
  %v1844 = vsel %vm1843, %v1836, %v1840
  %v1845 = vand.u32 2147483647, %v1835
  %vm1846 = vcmp.eq.f32.partialorder %v1845, 8.507059e+37
  %v1847 = vand.u32 %v1835, 2147483648
  %v1848 = vor.u32 1.1754944e-38, %v1847
  %v1849 = vsel %vm1846, %v1848, %v1844
  %v1850 = vmul.f32 1.0, %v1849
  %v1851 = vmul.f32 %v1830, %v1702
  %v1852 = vmul.f32 %v1811, %v1831
  %v1853 = vadd.f32 %v1851, %v1852
  %v1854 = vtanh.pop %v1853
  %v1855 = vmul.f32 %v1850, %v1854
  %v1856 = vld [vmem:[%s773] sm:$0xff]
  %v1857 = vld [vmem:[%s773 + $0x8] sm:$0xff]
  %v1858 = vld [vmem:[%s773 + $0x10] sm:$0xff]
  %v1859 = vld [vmem:[%s773 + $0x18] sm:$0xff]
  %1860 = vmatpush.msra.mxu0 %v950
  %1861 = vmatpush.msra.mxu0 %v946
  %1862 = vmatpush.msra.mxu0 %v942
  %1863 = vmatpush.msra.mxu0 %v938
  %1864 = vmatpush.msra.mxu0 %v934
  %1865 = vmatpush.msra.mxu0 %v930
  %1866 = vmatpush.msra.mxu0 %v926
  %1867 = vmatpush.msra.mxu0 %v922
  %1868 = vmatpush.msra.mxu0 %v918
  %1869 = vmatpush.msra.mxu0 %v914
  %1870 = vmatpush.msra.mxu0 %v910
  %1871 = vmatpush.msra.mxu0 %v906
  %1872 = vmatpush.msra.mxu0 %v902
  %1873 = vmatpush.msra.mxu0 %v898
  %1874 = vmatpush.msra.mxu0 %v894
  %1875 = vmatpush.msra.mxu0 %v890
  %1876 = vmatmul.f32.gmra.mxu0 %v1855
  %v1877 = vpop.f32.mrf.mxu0
  %v1878 = vadd.f32 0.0, %v1877
  %1879 = vdwg.mxu0
  %1880 = vmatpush.msra.mxu0 %v951
  %1881 = vmatpush.msra.mxu0 %v947
  %1882 = vmatpush.msra.mxu0 %v943
  %1883 = vmatpush.msra.mxu0 %v939
  %1884 = vmatpush.msra.mxu0 %v935
  %1885 = vmatpush.msra.mxu0 %v931
  %1886 = vmatpush.msra.mxu0 %v927
  %1887 = vmatpush.msra.mxu0 %v923
  %1888 = vmatpush.msra.mxu0 %v919
  %1889 = vmatpush.msra.mxu0 %v915
  %1890 = vmatpush.msra.mxu0 %v911
  %1891 = vmatpush.msra.mxu0 %v907
  %1892 = vmatpush.msra.mxu0 %v903
  %1893 = vmatpush.msra.mxu0 %v899
  %1894 = vmatpush.msra.mxu0 %v895
  %1895 = vmatpush.msra.mxu0 %v891
  %1896 = vmatmul.f32.gmra.mxu0 %v1855
  %v1897 = vpop.f32.mrf.mxu0
  %v1898 = vadd.f32 0.0, %v1897
  %1899 = vdwg.mxu0
  %1900 = vmatpush.msra.mxu0 %v952
  %1901 = vmatpush.msra.mxu0 %v948
  %1902 = vmatpush.msra.mxu0 %v944
  %1903 = vmatpush.msra.mxu0 %v940
  %1904 = vmatpush.msra.mxu0 %v936
  %1905 = vmatpush.msra.mxu0 %v932
  %1906 = vmatpush.msra.mxu0 %v928
  %1907 = vmatpush.msra.mxu0 %v924
  %1908 = vmatpush.msra.mxu0 %v920
  %1909 = vmatpush.msra.mxu0 %v916
  %1910 = vmatpush.msra.mxu0 %v912
  %1911 = vmatpush.msra.mxu0 %v908
  %1912 = vmatpush.msra.mxu0 %v904
  %1913 = vmatpush.msra.mxu0 %v900
  %1914 = vmatpush.msra.mxu0 %v896
  %1915 = vmatpush.msra.mxu0 %v892
  %1916 = vmatmul.f32.gmra.mxu0 %v1855
  %v1917 = vpop.f32.mrf.mxu0
  %v1918 = vadd.f32 0.0, %v1917
  %1919 = vdwg.mxu0
  %1920 = vmatpush.msra.mxu0 %v953
  %1921 = vmatpush.msra.mxu0 %v949
  %1922 = vmatpush.msra.mxu0 %v945
  %1923 = vmatpush.msra.mxu0 %v941
  %1924 = vmatpush.msra.mxu0 %v937
  %1925 = vmatpush.msra.mxu0 %v933
  %1926 = vmatpush.msra.mxu0 %v929
  %1927 = vmatpush.msra.mxu0 %v925
  %1928 = vmatpush.msra.mxu0 %v921
  %1929 = vmatpush.msra.mxu0 %v917
  %1930 = vmatpush.msra.mxu0 %v913
  %1931 = vmatpush.msra.mxu0 %v909
  %1932 = vmatpush.msra.mxu0 %v905
  %1933 = vmatpush.msra.mxu0 %v901
  %1934 = vmatpush.msra.mxu0 %v897
  %1935 = vmatpush.msra.mxu0 %v893
  %1936 = vmatmul.f32.gmra.mxu0 %v1855
  %v1937 = vpop.f32.mrf.mxu0
  %v1938 = vadd.f32 0.0, %v1937
  %1939 = vdwg.mxu0
  %v1940 = vadd.f32 %v1856, %v1878
  %v1941 = vadd.f32 %v1857, %v1898
  %v1942 = vadd.f32 %v1858, %v1918
  %v1943 = vadd.f32 %v1859, %v1938
  %v1944 = vxor.u32 %v1940, 2147483648
  %v1945 = vmul.f32 %v1944, 1.442695
  %v1946 = vpow.pop %v1945
  %v1947 = vadd.f32 %v1946, 1.0
  %v1948 = vrcp.pop %v1947
  %v1949 = vmul.f32 %v1947, %v1948
  %v1950 = vsub.f32 1.0, %v1949
  %v1951 = vmul.f32 %v1948, %v1950
  %v1952 = vadd.f32 %v1948, %v1951
  %vm1953 = vweird.f32 %v1947
  %vm1954 = vweird.f32 %v1948
  %vm1955 = vmor %vm1953, %vm1954
  %v1956 = vsel %vm1955, %v1948, %v1952
  %v1957 = vand.u32 2147483647, %v1947
  %vm1958 = vcmp.eq.f32.partialorder %v1957, 8.507059e+37
  %v1959 = vand.u32 %v1947, 2147483648
  %v1960 = vor.u32 1.1754944e-38, %v1959
  %v1961 = vsel %vm1958, %v1960, %v1956
  %v1962 = vmul.f32 1.0, %v1961
  %v1963 = vxor.u32 %v1941, 2147483648
  %v1964 = vmul.f32 %v1963, 1.442695
  %v1965 = vpow.pop %v1964
  %v1966 = vadd.f32 %v1965, 1.0
  %v1967 = vrcp.pop %v1966
  %v1968 = vmul.f32 %v1966, %v1967
  %v1969 = vsub.f32 1.0, %v1968
  %v1970 = vmul.f32 %v1967, %v1969
  %v1971 = vadd.f32 %v1967, %v1970
  %vm1972 = vweird.f32 %v1966
  %vm1973 = vweird.f32 %v1967
  %vm1974 = vmor %vm1972, %vm1973
  %v1975 = vsel %vm1974, %v1967, %v1971
  %v1976 = vand.u32 2147483647, %v1966
  %vm1977 = vcmp.eq.f32.partialorder %v1976, 8.507059e+37
  %v1978 = vand.u32 %v1966, 2147483648
  %v1979 = vor.u32 1.1754944e-38, %v1978
  %v1980 = vsel %vm1977, %v1979, %v1975
  %v1981 = vmul.f32 1.0, %v1980
  %v1982 = vtanh.pop %v1942
  %v1983 = vxor.u32 %v1943, 2147483648
  %v1984 = vmul.f32 %v1983, 1.442695
  %v1985 = vpow.pop %v1984
  %v1986 = vadd.f32 %v1985, 1.0
  %v1987 = vrcp.pop %v1986
  %v1988 = vmul.f32 %v1986, %v1987
  %v1989 = vsub.f32 1.0, %v1988
  %v1990 = vmul.f32 %v1987, %v1989
  %v1991 = vadd.f32 %v1987, %v1990
  %vm1992 = vweird.f32 %v1986
  %vm1993 = vweird.f32 %v1987
  %vm1994 = vmor %vm1992, %vm1993
  %v1995 = vsel %vm1994, %v1987, %v1991
  %v1996 = vand.u32 2147483647, %v1986
  %vm1997 = vcmp.eq.f32.partialorder %v1996, 8.507059e+37
  %v1998 = vand.u32 %v1986, 2147483648
  %v1999 = vor.u32 1.1754944e-38, %v1998
  %v2000 = vsel %vm1997, %v1999, %v1995
  %v2001 = vmul.f32 1.0, %v2000
  %v2002 = vmul.f32 %v1981, %v1853
  %v2003 = vmul.f32 %v1962, %v1982
  %v2004 = vadd.f32 %v2002, %v2003
  %v2005 = vtanh.pop %v2004
  %v2006 = vmul.f32 %v2001, %v2005
  %v2007 = vld [vmem:[%s881] sm:$0xff]
  %v2008 = vld [vmem:[%s881 + $0x8] sm:$0xff]
  %v2009 = vld [vmem:[%s881 + $0x10] sm:$0xff]
  %v2010 = vld [vmem:[%s881 + $0x18] sm:$0xff]
  %2011 = vmatpush.msra.mxu0 %v950
  %2012 = vmatpush.msra.mxu0 %v946
  %2013 = vmatpush.msra.mxu0 %v942
  %2014 = vmatpush.msra.mxu0 %v938
  %2015 = vmatpush.msra.mxu0 %v934
  %2016 = vmatpush.msra.mxu0 %v930
  %2017 = vmatpush.msra.mxu0 %v926
  %2018 = vmatpush.msra.mxu0 %v922
  %2019 = vmatpush.msra.mxu0 %v918
  %2020 = vmatpush.msra.mxu0 %v914
  %2021 = vmatpush.msra.mxu0 %v910
  %2022 = vmatpush.msra.mxu0 %v906
  %2023 = vmatpush.msra.mxu0 %v902
  %2024 = vmatpush.msra.mxu0 %v898
  %2025 = vmatpush.msra.mxu0 %v894
  %2026 = vmatpush.msra.mxu0 %v890
  %2027 = vmatmul.f32.gmra.mxu0 %v2006
  %v2028 = vpop.f32.mrf.mxu0
  %v2029 = vadd.f32 0.0, %v2028
  %2030 = vdwg.mxu0
  %2031 = vmatpush.msra.mxu0 %v951
  %2032 = vmatpush.msra.mxu0 %v947
  %2033 = vmatpush.msra.mxu0 %v943
  %2034 = vmatpush.msra.mxu0 %v939
  %2035 = vmatpush.msra.mxu0 %v935
  %2036 = vmatpush.msra.mxu0 %v931
  %2037 = vmatpush.msra.mxu0 %v927
  %2038 = vmatpush.msra.mxu0 %v923
  %2039 = vmatpush.msra.mxu0 %v919
  %2040 = vmatpush.msra.mxu0 %v915
  %2041 = vmatpush.msra.mxu0 %v911
  %2042 = vmatpush.msra.mxu0 %v907
  %2043 = vmatpush.msra.mxu0 %v903
  %2044 = vmatpush.msra.mxu0 %v899
  %2045 = vmatpush.msra.mxu0 %v895
  %2046 = vmatpush.msra.mxu0 %v891
  %2047 = vmatmul.f32.gmra.mxu0 %v2006
  %v2048 = vpop.f32.mrf.mxu0
  %v2049 = vadd.f32 0.0, %v2048
  %2050 = vdwg.mxu0
  %2051 = vmatpush.msra.mxu0 %v952
  %2052 = vmatpush.msra.mxu0 %v948
  %2053 = vmatpush.msra.mxu0 %v944
  %2054 = vmatpush.msra.mxu0 %v940
  %2055 = vmatpush.msra.mxu0 %v936
  %2056 = vmatpush.msra.mxu0 %v932
  %2057 = vmatpush.msra.mxu0 %v928
  %2058 = vmatpush.msra.mxu0 %v924
  %2059 = vmatpush.msra.mxu0 %v920
  %2060 = vmatpush.msra.mxu0 %v916
  %2061 = vmatpush.msra.mxu0 %v912
  %2062 = vmatpush.msra.mxu0 %v908
  %2063 = vmatpush.msra.mxu0 %v904
  %2064 = vmatpush.msra.mxu0 %v900
  %2065 = vmatpush.msra.mxu0 %v896
  %2066 = vmatpush.msra.mxu0 %v892
  %2067 = vmatmul.f32.gmra.mxu0 %v2006
  %v2068 = vpop.f32.mrf.mxu0
  %v2069 = vadd.f32 0.0, %v2068
  %2070 = vdwg.mxu0
  %2071 = vmatpush.msra.mxu0 %v953
  %2072 = vmatpush.msra.mxu0 %v949
  %2073 = vmatpush.msra.mxu0 %v945
  %2074 = vmatpush.msra.mxu0 %v941
  %2075 = vmatpush.msra.mxu0 %v937
  %2076 = vmatpush.msra.mxu0 %v933
  %2077 = vmatpush.msra.mxu0 %v929
  %2078 = vmatpush.msra.mxu0 %v925
  %2079 = vmatpush.msra.mxu0 %v921
  %2080 = vmatpush.msra.mxu0 %v917
  %2081 = vmatpush.msra.mxu0 %v913
  %2082 = vmatpush.msra.mxu0 %v909
  %2083 = vmatpush.msra.mxu0 %v905
  %2084 = vmatpush.msra.mxu0 %v901
  %2085 = vmatpush.msra.mxu0 %v897
  %2086 = vmatpush.msra.mxu0 %v893
  %2087 = vmatmul.f32.gmra.mxu0 %v2006
  %v2088 = vpop.f32.mrf.mxu0
  %v2089 = vadd.f32 0.0, %v2088
  %2090 = vdwg.mxu0
  %v2091 = vadd.f32 %v2007, %v2029
  %v2092 = vadd.f32 %v2008, %v2049
  %v2093 = vadd.f32 %v2009, %v2069
  %v2094 = vadd.f32 %v2010, %v2089
  %v2095 = vxor.u32 %v2091, 2147483648
  %v2096 = vmul.f32 %v2095, 1.442695
  %v2097 = vpow.pop %v2096
  %v2098 = vadd.f32 %v2097, 1.0
  %v2099 = vrcp.pop %v2098
  %v2100 = vmul.f32 %v2098, %v2099
  %v2101 = vsub.f32 1.0, %v2100
  %v2102 = vmul.f32 %v2099, %v2101
  %v2103 = vadd.f32 %v2099, %v2102
  %vm2104 = vweird.f32 %v2098
  %vm2105 = vweird.f32 %v2099
  %vm2106 = vmor %vm2104, %vm2105
  %v2107 = vsel %vm2106, %v2099, %v2103
  %v2108 = vand.u32 2147483647, %v2098
  %vm2109 = vcmp.eq.f32.partialorder %v2108, 8.507059e+37
  %v2110 = vand.u32 %v2098, 2147483648
  %v2111 = vor.u32 1.1754944e-38, %v2110
  %v2112 = vsel %vm2109, %v2111, %v2107
  %v2113 = vmul.f32 1.0, %v2112
  %v2114 = vxor.u32 %v2092, 2147483648
  %v2115 = vmul.f32 %v2114, 1.442695
  %v2116 = vpow.pop %v2115
  %v2117 = vadd.f32 %v2116, 1.0
  %v2118 = vrcp.pop %v2117
  %v2119 = vmul.f32 %v2117, %v2118
  %v2120 = vsub.f32 1.0, %v2119
  %v2121 = vmul.f32 %v2118, %v2120
  %v2122 = vadd.f32 %v2118, %v2121
  %vm2123 = vweird.f32 %v2117
  %vm2124 = vweird.f32 %v2118
  %vm2125 = vmor %vm2123, %vm2124
  %v2126 = vsel %vm2125, %v2118, %v2122
  %v2127 = vand.u32 2147483647, %v2117
  %vm2128 = vcmp.eq.f32.partialorder %v2127, 8.507059e+37
  %v2129 = vand.u32 %v2117, 2147483648
  %v2130 = vor.u32 1.1754944e-38, %v2129
  %v2131 = vsel %vm2128, %v2130, %v2126
  %v2132 = vmul.f32 1.0, %v2131
  %v2133 = vtanh.pop %v2093
  %v2134 = vxor.u32 %v2094, 2147483648
  %v2135 = vmul.f32 %v2134, 1.442695
  %v2136 = vpow.pop %v2135
  %v2137 = vadd.f32 %v2136, 1.0
  %v2138 = vrcp.pop %v2137
  %v2139 = vmul.f32 %v2137, %v2138
  %v2140 = vsub.f32 1.0, %v2139
  %v2141 = vmul.f32 %v2138, %v2140
  %v2142 = vadd.f32 %v2138, %v2141
  %vm2143 = vweird.f32 %v2137
  %vm2144 = vweird.f32 %v2138
  %vm2145 = vmor %vm2143, %vm2144
  %v2146 = vsel %vm2145, %v2138, %v2142
  %v2147 = vand.u32 2147483647, %v2137
  %vm2148 = vcmp.eq.f32.partialorder %v2147, 8.507059e+37
  %v2149 = vand.u32 %v2137, 2147483648
  %v2150 = vor.u32 1.1754944e-38, %v2149
  %v2151 = vsel %vm2148, %v2150, %v2146
  %v2152 = vmul.f32 1.0, %v2151
  %v2153 = vmul.f32 %v2132, %v2004
  %v2154 = vmul.f32 %v2113, %v2133
  %v2155 = vadd.f32 %v2153, %v2154
  %v2156 = vtanh.pop %v2155
  %v2157 = vmul.f32 %v2152, %v2156
  %v2158 = vld [vmem:[%s4] sm:$0xff]
  %v2159 = vld [vmem:[%s4 + $0x8] sm:$0xff]
  %v2160 = vld [vmem:[%s4 + $0x10] sm:$0xff]
  %v2161 = vld [vmem:[%s4 + $0x18] sm:$0xff]
  %v2162 = vld [vmem:[%s4 + $0x20] sm:$0xff]
  %v2163 = vld [vmem:[%s4 + $0x28] sm:$0xff]
  %v2164 = vld [vmem:[%s4 + $0x30] sm:$0xff]
  %v2165 = vld [vmem:[%s4 + $0x38] sm:$0xff]
  %v2166 = vld [vmem:[%s4 + $0x40] sm:$0xff]
  %v2167 = vld [vmem:[%s4 + $0x48] sm:$0xff]
  %v2168 = vld [vmem:[%s4 + $0x50] sm:$0xff]
  %v2169 = vld [vmem:[%s4 + $0x58] sm:$0xff]
  %v2170 = vld [vmem:[%s4 + $0x60] sm:$0xff]
  %v2171 = vld [vmem:[%s4 + $0x68] sm:$0xff]
  %v2172 = vld [vmem:[%s4 + $0x70] sm:$0xff]
  %v2173 = vld [vmem:[%s4 + $0x78] sm:$0xff]
  %v2174 = vld [vmem:[%s5] sm:$0x1]
  %v2176 = vperm.slane %v2174, 0
  %2178 = vmatpush.msra.mxu0 %v2173
  %2179 = vmatpush.msra.mxu0 %v2172
  %2180 = vmatpush.msra.mxu0 %v2171
  %2181 = vmatpush.msra.mxu0 %v2170
  %2182 = vmatpush.msra.mxu0 %v2169
  %2183 = vmatpush.msra.mxu0 %v2168
  %2184 = vmatpush.msra.mxu0 %v2167
  %2185 = vmatpush.msra.mxu0 %v2166
  %2186 = vmatpush.msra.mxu0 %v2165
  %2187 = vmatpush.msra.mxu0 %v2164
  %2188 = vmatpush.msra.mxu0 %v2163
  %2189 = vmatpush.msra.mxu0 %v2162
  %2190 = vmatpush.msra.mxu0 %v2161
  %2191 = vmatpush.msra.mxu0 %v2160
  %2192 = vmatpush.msra.mxu0 %v2159
  %2193 = vmatpush.msra.mxu0 %v2158
  %2194 = vmatmul.f32.gmra.mxu0 %v2157
  %v2195 = vpop.f32.mrf.mxu0
  %v2196 = vadd.f32 %v2176, %v2195
  %2197 = vdwg.mxu0
  %2198 = vst [vmem:[%s6] sm:$0xff] %v2196
  // Predicated region
  $region26: #{recurrent_neural_network_forward.1} parent=0 // pred_check
    _
  $region27: #{recurrent_neural_network_forward.1} parent=0 // pred_check_branch
    %2200 = sbr.rel (0) target = $region29
  $region28: #{recurrent_neural_network_forward.1} parent=0 // pred_region
    _
  $region29: #{recurrent_neural_network_forward.1} parent=0 // pred_fallthru
    _
  // Predicated region
  $region30: #{recurrent_neural_network_forward.1} parent=0 // pred_check
    _
  $region31: #{recurrent_neural_network_forward.1} parent=0 // pred_check_branch
    %2202 = sbr.rel (0) target = $region33
  $region32: #{recurrent_neural_network_forward.1} parent=0 // pred_region
    _
  $region33: #{recurrent_neural_network_forward.1} parent=0 // pred_fallthru
    _

</llo_original>
